<compile_context>
chip_gen: v7x
topology: tpu7x:2x2x1
jax: 0.10.0
libtpu: 0.0.40
codegen_flags: <defaults>
</compile_context>

<pallas_src>
import jax
import jax.numpy as jnp
from jax.experimental import pallas as pl
from jax.experimental.pallas import tpu as pltpu


def _self_attention_narrow_kernel(x_ref, wkqv_ref, wu_ref, bu_ref, o_ref,
                                  q_scr, k_scr, v_scr):
    # x_ref:    (bb, h, t, s)   head-major activation block (compute dtype)
    # wkqv_ref: (s, 3s)         fused [Wk^T | Wq^T/sqrt(e) | Wv^T]
    # wu_ref:   (h, s, e)       unifyheads W^T split per head
    # bu_ref:   (1, e)          unifyheads bias (f32)
    # o_ref:    (bb, tq, e)     output tile (original dtype), lane-dense
    # q_scr/k_scr/v_scr: (bb*h, t, s) VMEM, persist across the q-tile grid axis
    bb, h, t, s = x_ref.shape
    tq = o_ref.shape[1]
    e = h * s
    cdt = q_scr.dtype
    j = pl.program_id(1)

    # Fused k/q/v projection once per batch block (weights are shared across heads);
    # cached in VMEM scratch and reused by every q-tile.
    @pl.when(j == 0)
    def _project():
        x = x_ref[...].reshape(bb * h * t, s)
        kqv = jnp.dot(x, wkqv_ref[...], preferred_element_type=jnp.float32)
        kqv = kqv.astype(cdt).reshape(bb * h, t, 3 * s)
        k_scr[...] = kqv[:, :, 0 * s:1 * s]
        q_scr[...] = kqv[:, :, 1 * s:2 * s]   # 1/sqrt(e) already folded into Wq
        v_scr[...] = kqv[:, :, 2 * s:3 * s]

    q0 = pl.multiple_of(j * tq, tq)
    q = q_scr[:, pl.ds(q0, tq), :]            # (bb*h, tq, s)
    k = k_scr[...]                            # (bb*h, t,  s)
    v = v_scr[...]

    # Attention batched over (batch, head); exact softmax, f32 statistics.
    scores = jnp.einsum('nqs,nks->nqk', q, k, preferred_element_type=jnp.float32)
    scores = scores - jnp.max(scores, axis=-1, keepdims=True)
    p = jnp.exp(scores)
    p = p * (1.0 / jnp.sum(p, axis=-1, keepdims=True))   # exact reciprocal

    out = jnp.einsum('nqk,nks->nqs', p.astype(cdt), v,
                     preferred_element_type=jnp.float32)  # (bb*h, tq, s)
    out = out.astype(cdt).reshape(bb, h, tq, s)

    # Unify heads without re-interleaving lanes: accumulate per-head (bb*tq, s) @ (s, e)
    # dots in f32 — output is produced lane-dense directly.
    y = jnp.dot(out[:, 0].reshape(bb * tq, s), wu_ref[0],
                preferred_element_type=jnp.float32)
    for hh in range(1, h):
        y = y + jnp.dot(out[:, hh].reshape(bb * tq, s), wu_ref[hh],
                        preferred_element_type=jnp.float32)
    y = y + bu_ref[...].astype(jnp.float32)
    o_ref[...] = y.reshape(bb, tq, e).astype(o_ref.dtype)


def _pad(n, m):
    return -(-n // m) * m


def _vmem_budget():
    """Generation-aware VMEM budget: ~55% of per-core capacity for tile sizing,
    ~80% as the compiler limit (headroom for internal scratch)."""
    try:
        cap = int(pltpu.get_tpu_info().vmem_capacity_bytes)
    except Exception:
        cap = 64 * 2 ** 20        # conservative fallback (v7x per-TensorCore size)
    budget = min(int(cap * 0.55), 80 * 2 ** 20)
    limit = min(int(cap * 0.80), 100 * 2 ** 20)
    return budget, limit


def _pick_q_tile(t, target):
    if t <= target:
        return t
    for cand in range(target, 7, -1):
        if t % cand == 0:
            return cand
    return t


def _pick_block_b(b, heads, t, tq, s, e, cb, ob, budget_bytes):
    """Largest batch block whose (conservative, padding-aware) VMEM footprint fits the
    budget, keeping the parallel batch axis >= 2 whenever b >= 2 (feeds both v7x TCs)."""
    f32 = 4

    def est(bb):
        x_blk = bb * heads * _pad(t, 8) * _pad(s, 128) * cb           # input tile
        o_blk = bb * _pad(tq, 8) * _pad(e, 128) * ob                  # output tile
        w_blk = (_pad(s, 8) * _pad(3 * s, 128) +
                 heads * _pad(s, 8) * _pad(e, 128)) * cb              # fused + unify W
        b_blk = 8 * _pad(e, 128) * f32                                # bias
        scr = 3 * bb * heads * _pad(t, 8) * _pad(s, 128) * cb         # q/k/v scratch
        kqv = bb * heads * _pad(t, 8) * _pad(3 * s, 128) * f32        # projection result
        sc = 2 * bb * heads * _pad(tq, 8) * _pad(t, 128) * f32        # scores + exp(p)
        att = bb * heads * _pad(tq, 8) * _pad(s, 128) * f32           # attention output
        acc = bb * _pad(tq, 8) * _pad(e, 128) * f32                   # unify accumulator
        return 2 * (x_blk + o_blk + w_blk + b_blk) + scr + kqv + sc + att + acc

    min_grid = 2 if b >= 2 else 1
    best = 1
    for bb in range(1, b + 1):
        if b % bb == 0 and (b // bb) >= min_grid and est(bb) <= budget_bytes:
            best = bb
    return best


def self_attention_narrow(x, wk, wq, wv, wu, bu, *, heads,
                          compute_dtype=jnp.bfloat16, q_tile_target=256):
    b, t, e = x.shape
    assert e % heads == 0
    s = e // heads
    out_dtype = x.dtype
    cdt = jnp.dtype(compute_dtype)
    cb = cdt.itemsize
    ob = jnp.dtype(out_dtype).itemsize

    # One-time parameter prep at trace level (tiny next to activations):
    #  * fold the 1/sqrt(e) score scale into the query weight,
    #  * fuse the three shared per-head projections into one (s, 3s) RHS,
    #  * split the unify weight per head so the kernel never re-interleaves heads,
    #  * cast matmul operands to compute_dtype (bf16 -> MXU-native, half the DMA bytes);
    #    the bias stays f32 (added after f32 accumulation).
    scale = 1.0 / float(e) ** 0.5
    w_kqv = jnp.concatenate([wk.T, (wq * scale).T, wv.T], axis=1).astype(cdt)
    wu_r = wu.T.reshape(heads, s, e).astype(cdt)
    bu2 = bu.reshape(1, e).astype(jnp.float32)

    # Head-major activations; the transpose fuses with the dtype cast in XLA.
    # TODO(synk): for very narrow heads the padded (t, s) x-tiles waste VMEM/DMA lines;
    #             a lane-dense (b, t, e) input with an in-kernel head split is an
    #             alternative worth measuring.
    xh = x.astype(cdt).reshape(b, t, heads, s).transpose(0, 2, 1, 3)

    tq = _pick_q_tile(t, q_tile_target)
    budget, vmem_limit = _vmem_budget()
    block_b = _pick_block_b(b, heads, t, tq, s, e, cb, ob, budget)
    grid = (b // block_b, t // tq)

    cost = pl.CostEstimate(
        flops=2 * b * t * e * s * 3 + 4 * b * heads * t * t * s + 2 * b * t * e * e,
        transcendentals=b * heads * t * t,
        bytes_accessed=b * t * e * (cb + ob) + (s * 3 * s + e * e) * cb + e * 4,
    )

    return pl.pallas_call(
        _self_attention_narrow_kernel,
        out_shape=jax.ShapeDtypeStruct((b, t, e), out_dtype),
        grid=grid,
        in_specs=[
            pl.BlockSpec((block_b, heads, t, s), lambda i, j: (i, 0, 0, 0)),  # x
            pl.BlockSpec((s, 3 * s), lambda i, j: (0, 0)),                    # fused Wk|Wq|Wv (W^T)
            pl.BlockSpec((heads, s, e), lambda i, j: (0, 0, 0)),              # unify W^T per head
            pl.BlockSpec((1, e), lambda i, j: (0, 0)),                        # unify bias (f32)
        ],
        out_specs=pl.BlockSpec((block_b, tq, e), lambda i, j: (i, j, 0)),
        scratch_shapes=[pltpu.VMEM((block_b * heads, t, s), cdt) for _ in range(3)],
        compiler_params=pltpu.CompilerParams(
            dimension_semantics=("parallel", "arbitrary"),
            vmem_limit_bytes=vmem_limit,
        ),
        cost_estimate=cost,
    )(xh, w_kqv, wu_r, bu2)


def _reference(x, wk, wq, wv, wu, bu, *, heads):
    # Pure-JAX reference mirroring the PyTorch forward exactly.
    b, t, e = x.shape
    s = e // heads
    xh = x.reshape(b, t, heads, s)
    keys = jnp.einsum('bths,os->btho', xh, wk)
    queries = jnp.einsum('bths,os->btho', xh, wq)
    values = jnp.einsum('bths,os->btho', xh, wv)
    queries = queries / e ** 0.25
    keys = keys / e ** 0.25
    dot = jnp.einsum('bqho,bkho->bhqk', queries, keys)
    dot = jax.nn.softmax(dot, axis=-1)
    out = jnp.einsum('bhqk,bkho->bqho', dot, values).reshape(b, t, e)
    return out @ wu.T + bu


if __name__ == "__main__":
    # Test 1: small shapes consistent with the module (emb divisible by heads).
    b, t, e, heads = 2, 8, 32, 8
    s = e // heads
    key = jax.random.PRNGKey(0)
    kx, kk, kq, kv, ku, kb = jax.random.split(key, 6)
    x = jax.random.normal(kx, (b, t, e), dtype=jnp.float32)
    wk = jax.random.normal(kk, (s, s), dtype=jnp.float32) * (1.0 / s ** 0.5)
    wq = jax.random.normal(kq, (s, s), dtype=jnp.float32) * (1.0 / s ** 0.5)
    wv = jax.random.normal(kv, (s, s), dtype=jnp.float32) * (1.0 / s ** 0.5)
    wu = jax.random.normal(ku, (e, e), dtype=jnp.float32) * (1.0 / e ** 0.5)
    bu = jax.random.normal(kb, (e,), dtype=jnp.float32) * 0.1

    ref = _reference(x, wk, wq, wv, wu, bu, heads=heads)

    # Exact-arithmetic validation path (f32 operands).
    out_f32 = jax.block_until_ready(
        self_attention_narrow(x, wk, wq, wv, wu, bu, heads=heads,
                              compute_dtype=jnp.float32))
    assert out_f32.shape == (b, t, e)
    assert jnp.allclose(out_f32, ref, atol=1e-4, rtol=1e-4), "f32 path mismatch"

    # Default fast path (bf16 MXU operands, f32 accumulation / softmax statistics).
    out_bf16 = jax.block_until_ready(
        self_attention_narrow(x, wk, wq, wv, wu, bu, heads=heads))
    assert jnp.allclose(out_bf16, ref, atol=5e-2, rtol=5e-2), "bf16 path mismatch"

    # Test 2: exercise the q-tiled grid axis (t // tq > 1) with the f32 path.
    b2, t2, e2, heads2 = 2, 256, 64, 4
    s2 = e2 // heads2
    k2 = jax.random.split(jax.random.PRNGKey(0), 6)
    x2 = jax.random.normal(k2[0], (b2, t2, e2), dtype=jnp.float32)
    wk2 = jax.random.normal(k2[1], (s2, s2), dtype=jnp.float32) * (1.0 / s2 ** 0.5)
    wq2 = jax.random.normal(k2[2], (s2, s2), dtype=jnp.float32) * (1.0 / s2 ** 0.5)
    wv2 = jax.random.normal(k2[3], (s2, s2), dtype=jnp.float32) * (1.0 / s2 ** 0.5)
    wu2 = jax.random.normal(k2[4], (e2, e2), dtype=jnp.float32) * (1.0 / e2 ** 0.5)
    bu2 = jax.random.normal(k2[5], (e2,), dtype=jnp.float32) * 0.1

    out2 = jax.block_until_ready(
        self_attention_narrow(x2, wk2, wq2, wv2, wu2, bu2, heads=heads2,
                              compute_dtype=jnp.float32, q_tile_target=128))
    ref2 = _reference(x2, wk2, wq2, wv2, wu2, bu2, heads=heads2)
    assert jnp.allclose(out2, ref2, atol=1e-3, rtol=1e-3), "q-tiled path mismatch"

    print("KERNEL_OK")
</pallas_src>

<mosaic_0001>
module attributes {stable_mosaic.version = 11 : i64} {
  func.func @_self_attention_narrow_kernel(%arg0: i32, %arg1: i32, %arg2: memref<1x8x8x4xf32, #tpu.memory_space<vmem>>, %arg3: memref<4x12xf32, #tpu.memory_space<vmem>>, %arg4: memref<8x4x32xf32, #tpu.memory_space<vmem>>, %arg5: memref<1x32xf32, #tpu.memory_space<vmem>>, %arg6: memref<1x8x32xf32, #tpu.memory_space<vmem>>, %arg7: memref<8x8x4xf32, #tpu.memory_space<vmem>>, %arg8: memref<8x8x4xf32, #tpu.memory_space<vmem>>, %arg9: memref<8x8x4xf32, #tpu.memory_space<vmem>>) attributes {dimension_semantics = [#tpu.dimension_semantics<parallel>, #tpu.dimension_semantics<arbitrary>], iteration_bounds = array<i64: 2, 1>, scalar_prefetch = 0 : i64, scratch_operands = 3 : i64, tpu.core_type = #tpu.core_type<tc>, window_params = [{transform_indices = @transform_0, window_bounds = array<i64: 1, 8, 8, 4>}, {pipeline_mode = #tpu.pipeline_mode<synchronous>, transform_indices = @transform_1, window_bounds = array<i64: 4, 12>}, {pipeline_mode = #tpu.pipeline_mode<synchronous>, transform_indices = @transform_2, window_bounds = array<i64: 8, 4, 32>}, {pipeline_mode = #tpu.pipeline_mode<synchronous>, transform_indices = @transform_3, window_bounds = array<i64: 1, 32>}, {transform_indices = @transform_4, window_bounds = array<i64: 1, 8, 32>}]} {
    %c0_i32 = arith.constant 0 : i32
    %0 = arith.cmpi eq, %arg1, %c0_i32 : i32
    %1 = arith.extui %0 : i1 to i32
    %c0_i32_0 = arith.constant 0 : i32
    %2 = arith.cmpi ne, %1, %c0_i32_0 : i32
    scf.if %2 {
      %c0_42 = arith.constant 0 : index
      %c0_43 = arith.constant 0 : index
      %c0_44 = arith.constant 0 : index
      %c0_45 = arith.constant 0 : index
      %83 = vector.load %arg2[%c0_42, %c0_43, %c0_44, %c0_45] : memref<1x8x8x4xf32, #tpu.memory_space<vmem>>, vector<1x8x8x4xf32>
      %84 = vector.shape_cast %83 : vector<1x8x8x4xf32> to vector<64x4xf32>
      %c0_46 = arith.constant 0 : index
      %c0_47 = arith.constant 0 : index
      %85 = vector.load %arg3[%c0_46, %c0_47] : memref<4x12xf32, #tpu.memory_space<vmem>>, vector<4x12xf32>
      %cst_48 = arith.constant dense<0.000000e+00> : vector<64x12xf32>
      %86 = tpu.matmul %84, %85, %cst_48 {dimension_numbers = #tpu.dot_dimension_numbers<[1], [0], [0], [1], [0, 0, 1, 1], [], []>} : vector<64x4xf32>, vector<4x12xf32>, vector<64x12xf32> -> vector<64x12xf32>
      %87 = vector.shape_cast %86 : vector<64x12xf32> to vector<8x8x12xf32>
      %88 = vector.extract_strided_slice %87 {offsets = [0, 0, 0], sizes = [8, 8, 4], strides = [1, 1, 1]} : vector<8x8x12xf32> to vector<8x8x4xf32>
      %c0_49 = arith.constant 0 : index
      %c0_50 = arith.constant 0 : index
      %c0_51 = arith.constant 0 : index
      %89 = vector.load %arg8[%c0_49, %c0_50, %c0_51] : memref<8x8x4xf32, #tpu.memory_space<vmem>>, vector<8x8x4xf32>
      tpu.vector_store %arg8[%c0_49, %c0_50, %c0_51], %88 {strides = array<i32>} : memref<8x8x4xf32, #tpu.memory_space<vmem>>, vector<8x8x4xf32>,
      %90 = vector.extract_strided_slice %87 {offsets = [0, 0, 4], sizes = [8, 8, 4], strides = [1, 1, 1]} : vector<8x8x12xf32> to vector<8x8x4xf32>
      %c0_52 = arith.constant 0 : index
      %c0_53 = arith.constant 0 : index
      %c0_54 = arith.constant 0 : index
      %91 = vector.load %arg7[%c0_52, %c0_53, %c0_54] : memref<8x8x4xf32, #tpu.memory_space<vmem>>, vector<8x8x4xf32>
      tpu.vector_store %arg7[%c0_52, %c0_53, %c0_54], %90 {strides = array<i32>} : memref<8x8x4xf32, #tpu.memory_space<vmem>>, vector<8x8x4xf32>,
      %92 = vector.extract_strided_slice %87 {offsets = [0, 0, 8], sizes = [8, 8, 4], strides = [1, 1, 1]} : vector<8x8x12xf32> to vector<8x8x4xf32>
      %c0_55 = arith.constant 0 : index
      %c0_56 = arith.constant 0 : index
      %c0_57 = arith.constant 0 : index
      %93 = vector.load %arg9[%c0_55, %c0_56, %c0_57] : memref<8x8x4xf32, #tpu.memory_space<vmem>>, vector<8x8x4xf32>
      tpu.vector_store %arg9[%c0_55, %c0_56, %c0_57], %92 {strides = array<i32>} : memref<8x8x4xf32, #tpu.memory_space<vmem>>, vector<8x8x4xf32>,
    } else {
    }
    %c8_i32 = arith.constant 8 : i32
    %3 = arith.muli %arg1, %c8_i32 : i32
    %4 = tpu.assume_multiple %3, 8 : i32
    %c0 = arith.constant 0 : index
    %5 = arith.index_cast %4 : i32 to index
    %c0_1 = arith.constant 0 : index
    %6 = vector.load %arg7[%c0, %5, %c0_1] : memref<8x8x4xf32, #tpu.memory_space<vmem>>, vector<8x8x4xf32>
    %c0_2 = arith.constant 0 : index
    %c0_3 = arith.constant 0 : index
    %c0_4 = arith.constant 0 : index
    %7 = vector.load %arg8[%c0_2, %c0_3, %c0_4] : memref<8x8x4xf32, #tpu.memory_space<vmem>>, vector<8x8x4xf32>
    %c0_5 = arith.constant 0 : index
    %c0_6 = arith.constant 0 : index
    %c0_7 = arith.constant 0 : index
    %8 = vector.load %arg9[%c0_5, %c0_6, %c0_7] : memref<8x8x4xf32, #tpu.memory_space<vmem>>, vector<8x8x4xf32>
    "tpu.trace_start"() <{level = 10 : i32, message = "nqs,nks->nqk"}> : () -> ()
    %cst = arith.constant dense<0.000000e+00> : vector<8x8x8xf32>
    %9 = tpu.matmul %6, %7, %cst {dimension_numbers = #tpu.dot_dimension_numbers<[2], [2], [1], [1], [0, 0, 0, 1, 1, 1], [0], [0]>} : vector<8x8x4xf32>, vector<8x8x4xf32>, vector<8x8x8xf32> -> vector<8x8x8xf32>
    "tpu.trace_stop"() : () -> ()
    %cst_8 = arith.constant dense<0xFF800000> : vector<8x8xf32>
    %10 = vector.multi_reduction <maximumf>, %9, %cst_8 [2] : vector<8x8x8xf32> to vector<8x8xf32>
    %11 = vector.shape_cast %10 : vector<8x8xf32> to vector<8x8x1xf32>
    %12 = vector.broadcast %11 : vector<8x8x1xf32> to vector<8x8x8xf32>
    %13 = arith.subf %9, %12 : vector<8x8x8xf32>
    %14 = math.exp %13 : vector<8x8x8xf32>
    %cst_9 = arith.constant dense<0.000000e+00> : vector<8x8xf32>
    %15 = vector.multi_reduction <add>, %14, %cst_9 [2] : vector<8x8x8xf32> to vector<8x8xf32>
    %16 = vector.shape_cast %15 : vector<8x8xf32> to vector<8x8x1xf32>
    %cst_10 = arith.constant 1.000000e+00 : f32
    %17 = vector.broadcast %cst_10 : f32 to vector<8x8x1xf32>
    %18 = arith.divf %17, %16 : vector<8x8x1xf32>
    %19 = vector.broadcast %18 : vector<8x8x1xf32> to vector<8x8x8xf32>
    %20 = arith.mulf %14, %19 : vector<8x8x8xf32>
    "tpu.trace_start"() <{level = 10 : i32, message = "nqk,nks->nqs"}> : () -> ()
    %cst_11 = arith.constant dense<0.000000e+00> : vector<8x8x4xf32>
    %21 = tpu.matmul %20, %8, %cst_11 {dimension_numbers = #tpu.dot_dimension_numbers<[2], [1], [1], [2], [0, 0, 0, 1, 1, 2], [0], [0]>} : vector<8x8x8xf32>, vector<8x8x4xf32>, vector<8x8x4xf32> -> vector<8x8x4xf32>
    "tpu.trace_stop"() : () -> ()
    %22 = vector.shape_cast %21 : vector<8x8x4xf32> to vector<1x8x8x4xf32>
    %23 = vector.extract_strided_slice %22 {offsets = [0, 0, 0, 0], sizes = [1, 1, 8, 4], strides = [1, 1, 1, 1]} : vector<1x8x8x4xf32> to vector<1x1x8x4xf32>
    %24 = vector.shape_cast %23 : vector<1x1x8x4xf32> to vector<1x8x4xf32>
    %25 = vector.shape_cast %24 : vector<1x8x4xf32> to vector<8x4xf32>
    %c0_12 = arith.constant 0 : index
    %c0_13 = arith.constant 0 : index
    %c0_14 = arith.constant 0 : index
    %26 = vector.load %arg4[%c0_12, %c0_13, %c0_14] : memref<8x4x32xf32, #tpu.memory_space<vmem>>, vector<1x4x32xf32>
    %27 = vector.shape_cast %26 : vector<1x4x32xf32> to vector<4x32xf32>
    %cst_15 = arith.constant dense<0.000000e+00> : vector<8x32xf32>
    %28 = tpu.matmul %25, %27, %cst_15 {dimension_numbers = #tpu.dot_dimension_numbers<[1], [0], [0], [1], [0, 0, 1, 1], [], []>} : vector<8x4xf32>, vector<4x32xf32>, vector<8x32xf32> -> vector<8x32xf32>
    %29 = vector.extract_strided_slice %22 {offsets = [0, 1, 0, 0], sizes = [1, 1, 8, 4], strides = [1, 1, 1, 1]} : vector<1x8x8x4xf32> to vector<1x1x8x4xf32>
    %30 = vector.shape_cast %29 : vector<1x1x8x4xf32> to vector<1x8x4xf32>
    %31 = vector.shape_cast %30 : vector<1x8x4xf32> to vector<8x4xf32>
    %c1 = arith.constant 1 : index
    %c0_16 = arith.constant 0 : index
    %c0_17 = arith.constant 0 : index
    %32 = vector.load %arg4[%c1, %c0_16, %c0_17] : memref<8x4x32xf32, #tpu.memory_space<vmem>>, vector<1x4x32xf32>
    %33 = vector.shape_cast %32 : vector<1x4x32xf32> to vector<4x32xf32>
    %cst_18 = arith.constant dense<0.000000e+00> : vector<8x32xf32>
    %34 = tpu.matmul %31, %33, %cst_18 {dimension_numbers = #tpu.dot_dimension_numbers<[1], [0], [0], [1], [0, 0, 1, 1], [], []>} : vector<8x4xf32>, vector<4x32xf32>, vector<8x32xf32> -> vector<8x32xf32>
    %35 = arith.addf %28, %34 : vector<8x32xf32>
    %36 = vector.extract_strided_slice %22 {offsets = [0, 2, 0, 0], sizes = [1, 1, 8, 4], strides = [1, 1, 1, 1]} : vector<1x8x8x4xf32> to vector<1x1x8x4xf32>
    %37 = vector.shape_cast %36 : vector<1x1x8x4xf32> to vector<1x8x4xf32>
    %38 = vector.shape_cast %37 : vector<1x8x4xf32> to vector<8x4xf32>
    %c2 = arith.constant 2 : index
    %c0_19 = arith.constant 0 : index
    %c0_20 = arith.constant 0 : index
    %39 = vector.load %arg4[%c2, %c0_19, %c0_20] : memref<8x4x32xf32, #tpu.memory_space<vmem>>, vector<1x4x32xf32>
    %40 = vector.shape_cast %39 : vector<1x4x32xf32> to vector<4x32xf32>
    %cst_21 = arith.constant dense<0.000000e+00> : vector<8x32xf32>
    %41 = tpu.matmul %38, %40, %cst_21 {dimension_numbers = #tpu.dot_dimension_numbers<[1], [0], [0], [1], [0, 0, 1, 1], [], []>} : vector<8x4xf32>, vector<4x32xf32>, vector<8x32xf32> -> vector<8x32xf32>
    %42 = arith.addf %35, %41 : vector<8x32xf32>
    %43 = vector.extract_strided_slice %22 {offsets = [0, 3, 0, 0], sizes = [1, 1, 8, 4], strides = [1, 1, 1, 1]} : vector<1x8x8x4xf32> to vector<1x1x8x4xf32>
    %44 = vector.shape_cast %43 : vector<1x1x8x4xf32> to vector<1x8x4xf32>
    %45 = vector.shape_cast %44 : vector<1x8x4xf32> to vector<8x4xf32>
    %c3 = arith.constant 3 : index
    %c0_22 = arith.constant 0 : index
    %c0_23 = arith.constant 0 : index
    %46 = vector.load %arg4[%c3, %c0_22, %c0_23] : memref<8x4x32xf32, #tpu.memory_space<vmem>>, vector<1x4x32xf32>
    %47 = vector.shape_cast %46 : vector<1x4x32xf32> to vector<4x32xf32>
    %cst_24 = arith.constant dense<0.000000e+00> : vector<8x32xf32>
    %48 = tpu.matmul %45, %47, %cst_24 {dimension_numbers = #tpu.dot_dimension_numbers<[1], [0], [0], [1], [0, 0, 1, 1], [], []>} : vector<8x4xf32>, vector<4x32xf32>, vector<8x32xf32> -> vector<8x32xf32>
    %49 = arith.addf %42, %48 : vector<8x32xf32>
    %50 = vector.extract_strided_slice %22 {offsets = [0, 4, 0, 0], sizes = [1, 1, 8, 4], strides = [1, 1, 1, 1]} : vector<1x8x8x4xf32> to vector<1x1x8x4xf32>
    %51 = vector.shape_cast %50 : vector<1x1x8x4xf32> to vector<1x8x4xf32>
    %52 = vector.shape_cast %51 : vector<1x8x4xf32> to vector<8x4xf32>
    %c4 = arith.constant 4 : index
    %c0_25 = arith.constant 0 : index
    %c0_26 = arith.constant 0 : index
    %53 = vector.load %arg4[%c4, %c0_25, %c0_26] : memref<8x4x32xf32, #tpu.memory_space<vmem>>, vector<1x4x32xf32>
    %54 = vector.shape_cast %53 : vector<1x4x32xf32> to vector<4x32xf32>
    %cst_27 = arith.constant dense<0.000000e+00> : vector<8x32xf32>
    %55 = tpu.matmul %52, %54, %cst_27 {dimension_numbers = #tpu.dot_dimension_numbers<[1], [0], [0], [1], [0, 0, 1, 1], [], []>} : vector<8x4xf32>, vector<4x32xf32>, vector<8x32xf32> -> vector<8x32xf32>
    %56 = arith.addf %49, %55 : vector<8x32xf32>
    %57 = vector.extract_strided_slice %22 {offsets = [0, 5, 0, 0], sizes = [1, 1, 8, 4], strides = [1, 1, 1, 1]} : vector<1x8x8x4xf32> to vector<1x1x8x4xf32>
    %58 = vector.shape_cast %57 : vector<1x1x8x4xf32> to vector<1x8x4xf32>
    %59 = vector.shape_cast %58 : vector<1x8x4xf32> to vector<8x4xf32>
    %c5 = arith.constant 5 : index
    %c0_28 = arith.constant 0 : index
    %c0_29 = arith.constant 0 : index
    %60 = vector.load %arg4[%c5, %c0_28, %c0_29] : memref<8x4x32xf32, #tpu.memory_space<vmem>>, vector<1x4x32xf32>
    %61 = vector.shape_cast %60 : vector<1x4x32xf32> to vector<4x32xf32>
    %cst_30 = arith.constant dense<0.000000e+00> : vector<8x32xf32>
    %62 = tpu.matmul %59, %61, %cst_30 {dimension_numbers = #tpu.dot_dimension_numbers<[1], [0], [0], [1], [0, 0, 1, 1], [], []>} : vector<8x4xf32>, vector<4x32xf32>, vector<8x32xf32> -> vector<8x32xf32>
    %63 = arith.addf %56, %62 : vector<8x32xf32>
    %64 = vector.extract_strided_slice %22 {offsets = [0, 6, 0, 0], sizes = [1, 1, 8, 4], strides = [1, 1, 1, 1]} : vector<1x8x8x4xf32> to vector<1x1x8x4xf32>
    %65 = vector.shape_cast %64 : vector<1x1x8x4xf32> to vector<1x8x4xf32>
    %66 = vector.shape_cast %65 : vector<1x8x4xf32> to vector<8x4xf32>
    %c6 = arith.constant 6 : index
    %c0_31 = arith.constant 0 : index
    %c0_32 = arith.constant 0 : index
    %67 = vector.load %arg4[%c6, %c0_31, %c0_32] : memref<8x4x32xf32, #tpu.memory_space<vmem>>, vector<1x4x32xf32>
    %68 = vector.shape_cast %67 : vector<1x4x32xf32> to vector<4x32xf32>
    %cst_33 = arith.constant dense<0.000000e+00> : vector<8x32xf32>
    %69 = tpu.matmul %66, %68, %cst_33 {dimension_numbers = #tpu.dot_dimension_numbers<[1], [0], [0], [1], [0, 0, 1, 1], [], []>} : vector<8x4xf32>, vector<4x32xf32>, vector<8x32xf32> -> vector<8x32xf32>
    %70 = arith.addf %63, %69 : vector<8x32xf32>
    %71 = vector.extract_strided_slice %22 {offsets = [0, 7, 0, 0], sizes = [1, 1, 8, 4], strides = [1, 1, 1, 1]} : vector<1x8x8x4xf32> to vector<1x1x8x4xf32>
    %72 = vector.shape_cast %71 : vector<1x1x8x4xf32> to vector<1x8x4xf32>
    %73 = vector.shape_cast %72 : vector<1x8x4xf32> to vector<8x4xf32>
    %c7 = arith.constant 7 : index
    %c0_34 = arith.constant 0 : index
    %c0_35 = arith.constant 0 : index
    %74 = vector.load %arg4[%c7, %c0_34, %c0_35] : memref<8x4x32xf32, #tpu.memory_space<vmem>>, vector<1x4x32xf32>
    %75 = vector.shape_cast %74 : vector<1x4x32xf32> to vector<4x32xf32>
    %cst_36 = arith.constant dense<0.000000e+00> : vector<8x32xf32>
    %76 = tpu.matmul %73, %75, %cst_36 {dimension_numbers = #tpu.dot_dimension_numbers<[1], [0], [0], [1], [0, 0, 1, 1], [], []>} : vector<8x4xf32>, vector<4x32xf32>, vector<8x32xf32> -> vector<8x32xf32>
    %77 = arith.addf %70, %76 : vector<8x32xf32>
    %c0_37 = arith.constant 0 : index
    %c0_38 = arith.constant 0 : index
    %78 = vector.load %arg5[%c0_37, %c0_38] : memref<1x32xf32, #tpu.memory_space<vmem>>, vector<1x32xf32>
    %79 = vector.broadcast %78 : vector<1x32xf32> to vector<8x32xf32>
    %80 = arith.addf %77, %79 : vector<8x32xf32>
    %81 = vector.shape_cast %80 : vector<8x32xf32> to vector<1x8x32xf32>
    %c0_39 = arith.constant 0 : index
    %c0_40 = arith.constant 0 : index
    %c0_41 = arith.constant 0 : index
    %82 = vector.load %arg6[%c0_39, %c0_40, %c0_41] : memref<1x8x32xf32, #tpu.memory_space<vmem>>, vector<1x8x32xf32>
    tpu.vector_store %arg6[%c0_39, %c0_40, %c0_41], %81 {strides = array<i32>} : memref<1x8x32xf32, #tpu.memory_space<vmem>>, vector<1x8x32xf32>,
    return
  }
  func.func @transform_0(%arg0: i32, %arg1: i32) -> (i32, i32, i32, i32) {
    %c0_i32 = arith.constant 0 : i32
    %c0_i32_0 = arith.constant 0 : i32
    %c0_i32_1 = arith.constant 0 : i32
    %c0_i32_2 = arith.constant 0 : i32
    return %arg0, %c0_i32, %c0_i32_0, %c0_i32_1 : i32, i32, i32, i32
  }
  func.func @transform_1(%arg0: i32, %arg1: i32) -> (i32, i32) {
    %c0_i32 = arith.constant 0 : i32
    %c0_i32_0 = arith.constant 0 : i32
    %c0_i32_1 = arith.constant 0 : i32
    return %c0_i32, %c0_i32_0 : i32, i32
  }
  func.func @transform_2(%arg0: i32, %arg1: i32) -> (i32, i32, i32) {
    %c0_i32 = arith.constant 0 : i32
    %c0_i32_0 = arith.constant 0 : i32
    %c0_i32_1 = arith.constant 0 : i32
    %c0_i32_2 = arith.constant 0 : i32
    return %c0_i32, %c0_i32_0, %c0_i32_1 : i32, i32, i32
  }
  func.func @transform_3(%arg0: i32, %arg1: i32) -> (i32, i32) {
    %c0_i32 = arith.constant 0 : i32
    %c0_i32_0 = arith.constant 0 : i32
    %c0_i32_1 = arith.constant 0 : i32
    return %c0_i32, %c0_i32_0 : i32, i32
  }
  func.func @transform_4(%arg0: i32, %arg1: i32) -> (i32, i32, i32) {
    %c0_i32 = arith.constant 0 : i32
    %c0_i32_0 = arith.constant 0 : i32
    return %arg0, %arg1, %c0_i32 : i32, i32, i32
  }
}

</mosaic_0001>

<llo_original>
// kernel: tpu_custom_call.1
$region0: #{tpu_custom_call.1}
  #allocation0 [shape = 'u32[]', space=smem, size = 0x4, offset = 0x4, fixed_abs, tag = 'smem constant byte address 0x4 - core index']
  #allocation1 [shape = 'u32[144,128]{1,0:T(1,128)}', space=vmem, size = 0x12000, scoped, tag = 'internal scratch']
  #allocation2 [shape = 'f32[8,8,4]{2,1,0:T(8,128)}', space=vmem, size = 0x8000, scoped, tag = 'scratch operand']
  #allocation3 [shape = 'f32[8,8,4]{2,1,0:T(8,128)}', space=vmem, size = 0x8000, scoped, tag = 'scratch operand']
  #allocation4 [shape = 'f32[8,8,4]{2,1,0:T(8,128)}', space=vmem, size = 0x8000, scoped, tag = 'scratch operand']
  %s0 = inlined_call_operand.vmem [shape: f32[2,8,8,4], index: 0, kind: input, shape index: {}]
  %s1 = inlined_call_operand.vmem [shape: f32[4,12], index: 1, kind: input, shape index: {}]
  %s2 = inlined_call_operand.vmem [shape: f32[8,4,32], index: 2, kind: input, shape index: {}]
  %s3 = inlined_call_operand.vmem [shape: f32[1,32], index: 3, kind: input, shape index: {}]
  %s4 = inlined_call_operand.hbm [shape: f32[2,8,32], index: 4, kind: output, shape index: {}]
  %s5 = sld [smem:[#allocation0]]
  $region53: #{tpu_custom_call.1} parent=0
    _
  %s7 = ssub.s32 1, %s5
  %s8 = scalar_select 0, %s7, %s5
  $region1: #{tpu_custom_call.1} parent=0
    #allocation5 [shape = 'u8[8192]{0}', space=vmem, size = 0x2000, scoped, tag = 'output window, operand 0']
    #allocation6 [shape = 's32[2]{0}', space=sflag, size = 0x8, scoped, tag = 'scoped memory for tpu_custom_call.1']
    %9 = vsyncpa [#allocation6], 0
    %s10 = scalar_lea.sflag [#allocation6], 1
    %11 = vsyncpa %s10, 0
    loop: start=0, step=1, limit=4
    $region2: #{tpu_custom_call.1} parent=1 // loop_pre_header
      _
    $region3: #{tpu_custom_call.1} parent=1 // loop_header
      %s13 = sphi 0, %s17
      %p14 = scmp.ge.s32.totalorder %s13, 4
      %s20 = sphi 0, %s32
      %s21 = sphi 0, %s28
      %s22 = sphi 0, %s20
      %s23 = sphi 0, %s21
      %s24 = sphi 0, %s22
      %s25 = sphi 0, %s23
      %s35 = sphi 0, %s37
      %s38 = sphi 0, %s35
      %s39 = sphi 0, %s38
      %s55 = sphi 0, %s39
      %s59 = sphi 0, %s59
      %s61 = sphi 0, %s59
      %s62 = sphi 0, %s61
      %s76 = sphi 0, %s62
      %s80 = sphi 0, %s80
      %s82 = sphi 0, %s80
      %s83 = sphi 0, %s82
      %s97 = sphi 0, %s83
      %s101 = sphi 0, %s101
      %s103 = sphi 0, %s101
      %s104 = sphi 0, %s103
      %s118 = sphi 0, %s104
      %s126 = sphi 0, %s128
      %s129 = sphi 0, %s126
      %s130 = sphi 0, %s129
      %s146 = sphi 0, %s130
    $region4: #{tpu_custom_call.1} parent=1 // loop_header_branch
      %16 = sbr.rel (%p14) target = $region8
    $region5: #{tpu_custom_call.1} parent=1 // loop_body
      %s18 = ssub.s32 %s13, 1
      %s19 = ssub.s32 %s13, 2
      %s26 = sadd.s32 1, %s21
      %p27 = scmp.ge.s32.totalorder %s26, 1
      %s28 = scalar_select %p27, 0, %s26
      %s29 = sadd.s32 1, %s20
      %s30 = scalar_select %p27, %s29, %s20
      %p31 = scmp.ge.s32.totalorder %s30, 2
      %s32 = scalar_select %p31, 0, %s30
      %s33 = ssub.s32 %s20, %s32
      %p34 = scmp.eq.s32.totalorder %s33, 0
      %s36 = sadd.s32 %s35, 1
      %s37 = scalar_select %p34, %s35, %s36
      %p40 = pneg %p34
      %p41 = scmp.eq.s32.totalorder %s13, 1
      %p42 = por %p40, %p41
      %p43 = scmp.ne.s32.totalorder %s35, %s38
      %p44 = scmp.eq.s32.totalorder %s13, 0
      %p45 = por %p43, %p44
      %p46 = scmp.ne.s32.totalorder %s35, %s38
      %p47 = scmp.eq.s32.totalorder %s18, 1
      %p48 = por %p46, %p47
      %p49 = scmp.ne.s32.totalorder %s38, %s39
      %p50 = scmp.eq.s32.totalorder %s18, 0
      %p51 = por %p49, %p50
      %p52 = scmp.ne.s32.totalorder %s38, %s39
      %p53 = scmp.eq.s32.totalorder %s19, 1
      %p54 = por %p52, %p53
      %p56 = scmp.ne.s32.totalorder %s39, %s55
      %p57 = scmp.eq.s32.totalorder %s19, 0
      %p58 = por %p56, %p57
      %s60 = sadd.s32 %s59, 1
      %p63 = scmp.eq.s32.totalorder %s13, 1
      %p64 = scmp.ne.s32.totalorder %s59, %s61
      %p65 = scmp.eq.s32.totalorder %s13, 0
      %p66 = por %p64, %p65
      %p67 = scmp.ne.s32.totalorder %s59, %s61
      %p68 = scmp.eq.s32.totalorder %s18, 1
      %p69 = por %p67, %p68
      %p70 = scmp.ne.s32.totalorder %s61, %s62
      %p71 = scmp.eq.s32.totalorder %s18, 0
      %p72 = por %p70, %p71
      %p73 = scmp.ne.s32.totalorder %s61, %s62
      %p74 = scmp.eq.s32.totalorder %s19, 1
      %p75 = por %p73, %p74
      %p77 = scmp.ne.s32.totalorder %s62, %s76
      %p78 = scmp.eq.s32.totalorder %s19, 0
      %p79 = por %p77, %p78
      %s81 = sadd.s32 %s80, 1
      %p84 = scmp.eq.s32.totalorder %s13, 1
      %p85 = scmp.ne.s32.totalorder %s80, %s82
      %p86 = scmp.eq.s32.totalorder %s13, 0
      %p87 = por %p85, %p86
      %p88 = scmp.ne.s32.totalorder %s80, %s82
      %p89 = scmp.eq.s32.totalorder %s18, 1
      %p90 = por %p88, %p89
      %p91 = scmp.ne.s32.totalorder %s82, %s83
      %p92 = scmp.eq.s32.totalorder %s18, 0
      %p93 = por %p91, %p92
      %p94 = scmp.ne.s32.totalorder %s82, %s83
      %p95 = scmp.eq.s32.totalorder %s19, 1
      %p96 = por %p94, %p95
      %p98 = scmp.ne.s32.totalorder %s83, %s97
      %p99 = scmp.eq.s32.totalorder %s19, 0
      %p100 = por %p98, %p99
      %s102 = sadd.s32 %s101, 1
      %p105 = scmp.eq.s32.totalorder %s13, 1
      %p106 = scmp.ne.s32.totalorder %s101, %s103
      %p107 = scmp.eq.s32.totalorder %s13, 0
      %p108 = por %p106, %p107
      %p109 = scmp.ne.s32.totalorder %s101, %s103
      %p110 = scmp.eq.s32.totalorder %s18, 1
      %p111 = por %p109, %p110
      %p112 = scmp.ne.s32.totalorder %s103, %s104
      %p113 = scmp.eq.s32.totalorder %s18, 0
      %p114 = por %p112, %p113
      %p115 = scmp.ne.s32.totalorder %s103, %s104
      %p116 = scmp.eq.s32.totalorder %s19, 1
      %p117 = por %p115, %p116
      %p119 = scmp.ne.s32.totalorder %s104, %s118
      %p120 = scmp.eq.s32.totalorder %s19, 0
      %p121 = por %p119, %p120
      %s122 = ssub.s32 %s20, %s32
      %s123 = ssub.s32 %s21, %s28
      %s124 = sor.u32 %s122, %s123
      %p125 = scmp.eq.s32.totalorder %s124, 0
      %s127 = sadd.s32 %s126, 1
      %s128 = scalar_select %p125, %s126, %s127
      %p131 = pneg %p125
      %p132 = scmp.eq.s32.totalorder %s13, 1
      %p133 = por %p131, %p132
      %p134 = scmp.ne.s32.totalorder %s126, %s129
      %p135 = scmp.eq.s32.totalorder %s13, 0
      %p136 = por %p134, %p135
      %p137 = scmp.ne.s32.totalorder %s126, %s129
      %p138 = scmp.eq.s32.totalorder %s18, 1
      %p139 = por %p137, %p138
      %p140 = scmp.ne.s32.totalorder %s129, %s130
      %p141 = scmp.eq.s32.totalorder %s18, 0
      %p142 = por %p140, %p141
      %p143 = scmp.ne.s32.totalorder %s129, %s130
      %p144 = scmp.eq.s32.totalorder %s19, 1
      %p145 = por %p143, %p144
      %p147 = scmp.ne.s32.totalorder %s130, %s146
      %p148 = scmp.eq.s32.totalorder %s19, 0
      %p149 = por %p147, %p148
      %p150 = scmp.le.s32.totalorder 1, %s13
      %p151 = scmp.lt.s32.totalorder %s13, 3
      %p152 = pnand %p150, %p151
      %p153 = pneg %p152
      // Predicated region
      $region9: #{tpu_custom_call.1} parent=5 // pred_check
        _
      $region10: #{tpu_custom_call.1} parent=5 // pred_check_branch
        %155 = sbr.rel (%p152) target = $region12
      $region11: #{tpu_custom_call.1} parent=5 // pred_region
        %s156 = ssub.s32 %s13, 1
        // Predicated region
        $region13: #{tpu_custom_call.1} parent=11 // pred_check
          %p157 = pneg %p72
        $region14: #{tpu_custom_call.1} parent=11 // pred_check_branch
          %159 = sbr.rel (%p157) target = $region16
        $region15: #{tpu_custom_call.1} parent=11 // pred_region
          _
        $region16: #{tpu_custom_call.1} parent=11 // pred_fallthru
          _
        // Predicated region
        $region17: #{tpu_custom_call.1} parent=11 // pred_check
          %p160 = pneg %p93
        $region18: #{tpu_custom_call.1} parent=11 // pred_check_branch
          %162 = sbr.rel (%p160) target = $region20
        $region19: #{tpu_custom_call.1} parent=11 // pred_region
          _
        $region20: #{tpu_custom_call.1} parent=11 // pred_fallthru
          _
        // Predicated region
        $region21: #{tpu_custom_call.1} parent=11 // pred_check
          %p163 = pneg %p114
        $region22: #{tpu_custom_call.1} parent=11 // pred_check_branch
          %165 = sbr.rel (%p163) target = $region24
        $region23: #{tpu_custom_call.1} parent=11 // pred_region
          _
        $region24: #{tpu_custom_call.1} parent=11 // pred_fallthru
          _
      $region12: #{tpu_custom_call.1} parent=5 // pred_fallthru
        _
      %p166 = scmp.lt.s32.totalorder %s13, 2
      // Predicated region
      $region25: #{tpu_custom_call.1} parent=5 // pred_check
        %p167 = pneg %p166
      $region26: #{tpu_custom_call.1} parent=5 // pred_check_branch
        %169 = sbr.rel (%p167) target = $region28
      $region27: #{tpu_custom_call.1} parent=5 // pred_region
        // Predicated region
        $region29: #{tpu_custom_call.1} parent=27 // pred_check
          %p170 = pneg %p45
        $region30: #{tpu_custom_call.1} parent=27 // pred_check_branch
          %172 = sbr.rel (%p170) target = $region32
        $region31: #{tpu_custom_call.1} parent=27 // pred_region
          %p173 = scmp.lt.s32.totalorder %s20, 1
          %s174 = scalar_select %p173, %s20, 1
          %s175 = smul.addr %s174, 8
          %s176 = smul.addr %s175, 8
          %s177 = scalar_lea.vmem %s0, %s176
        $region32: #{tpu_custom_call.1} parent=27 // pred_fallthru
          _
      $region28: #{tpu_custom_call.1} parent=5 // pred_fallthru
        _
      %p178 = scmp.le.s32.totalorder 1, %s13
      %p179 = scmp.lt.s32.totalorder %s13, 3
      %p180 = pnand %p178, %p179
      %p181 = pneg %p180
      // Predicated region
      $region33: #{tpu_custom_call.1} parent=5 // pred_check
        _
      $region34: #{tpu_custom_call.1} parent=5 // pred_check_branch
        %183 = sbr.rel (%p180) target = $region36
      $region35: #{tpu_custom_call.1} parent=5 // pred_region
        %s184 = ssub.s32 %s13, 1
        %p185 = scmp.lt.s32.totalorder %s22, 1
        %s186 = scalar_select %p185, %s22, 1
        %s187 = smul.addr %s186, 8
        %s188 = smul.addr %s187, 8
        %s189 = scalar_lea.vmem %s0, %s188
        %p190 = pneg %p51
        %p191 = pneg %p48
        %p192 = pneg %p72
        %p193 = pneg %p69
        %p194 = pneg %p93
        %p195 = pneg %p90
        %p196 = pneg %p114
        %p197 = pneg %p111
        %p198 = pneg %p142
        %p199 = pneg %p139
        %s200 = sand.u32 %s129, 1
        %s201 = scalar_lea.sflag [#allocation6], %s200
        %s202 = sand.u32 %s129, 1
        %s203 = smul.addr %s202, 8
        %s204 = scalar_lea.vmem [#allocation5], %s203
        %p205 = scmp.lt.s32.totalorder %s22, 1
        %s206 = scalar_select %p205, %s22, 1
        %s207 = smul.addr %s206, 8
        %s208 = smul.addr %s207, 8
        %s209 = scalar_lea.vmem %s0, %s208
        %p210 = scmp.eq.s32.totalorder %s23, 0
        // Predicated region
        $region37: #{tpu_custom_call.1} parent=35 // pred_check
          %p211 = pneg %p210
        $region38: #{tpu_custom_call.1} parent=35 // pred_check_branch
          %213 = sbr.rel (%p211) target = $region40
        $region39: #{tpu_custom_call.1} parent=35 // pred_region
          %v214 = vld [vmem:[%s209] sm:$0xff]
          %v215 = vld [vmem:[%s209 + $0x8] sm:$0xff]
          %v216 = vld [vmem:[%s209 + $0x10] sm:$0xff]
          %v217 = vld [vmem:[%s209 + $0x18] sm:$0xff]
          %v218 = vld [vmem:[%s209 + $0x20] sm:$0xff]
          %v219 = vld [vmem:[%s209 + $0x28] sm:$0xff]
          %v220 = vld [vmem:[%s209 + $0x30] sm:$0xff]
          %v221 = vld [vmem:[%s209 + $0x38] sm:$0xff]
          %v222 = vld [vmem:[%s1] sm:$0xf]
          %vm223 = vcmask 31744
          %v225 = vsel %vm223, %v214, 0
          %v228 = vsel %vm223, %v215, 0
          %v231 = vsel %vm223, %v216, 0
          %v234 = vsel %vm223, %v217, 0
          %v237 = vsel %vm223, %v218, 0
          %v240 = vsel %vm223, %v219, 0
          %v243 = vsel %vm223, %v220, 0
          %v246 = vsel %vm223, %v221, 0
          %vm248 = vcmask 1043456
          %v250 = vsel %vm248, %v222, 0
          %252 = vmatprep.subr.mxu0 0.0
          %253 = vmatpush1.msra.mxu0 %v250
          %254 = vmatprep.subr.mxu0 0.0
          %255 = vmatpush1.msra.mxu0 0.0
          %256 = vmatprep.subr.mxu0 0.0
          %257 = vmatpush1.msra.mxu0 0.0
          %258 = vmatprep.subr.mxu0 0.0
          %259 = vmatpush1.msra.mxu0 0.0
          %260 = vmatprep.subr.mxu0 0.0
          %261 = vmatpush1.msra.mxu0 0.0
          %262 = vmatprep.subr.mxu0 0.0
          %263 = vmatpush1.msra.mxu0 0.0
          %264 = vmatprep.subr.mxu0 0.0
          %265 = vmatpush1.msra.mxu0 0.0
          %266 = vmatprep.subr.mxu0 0.0
          %267 = vmatpush1.msra.mxu0 0.0
          %268 = vmatprep.subr.mxu0 0.0
          %269 = vmatpush1.msra.mxu0 0.0
          %270 = vmatprep.subr.mxu0 0.0
          %271 = vmatpush1.msra.mxu0 0.0
          %272 = vmatprep.subr.mxu0 0.0
          %273 = vmatpush1.msra.mxu0 0.0
          %274 = vmatprep.subr.mxu0 0.0
          %275 = vmatpush1.msra.mxu0 0.0
          %276 = vmatprep.subr.mxu0 0.0
          %277 = vmatpush1.msra.mxu0 0.0
          %278 = vmatprep.subr.mxu0 0.0
          %279 = vmatpush1.msra.mxu0 0.0
          %280 = vmatprep.subr.mxu0 0.0
          %281 = vmatpush1.msra.mxu0 0.0
          %282 = vmatprep.subr.mxu0 0.0
          %283 = vmatpush1.msra.mxu0 0.0
          %284 = vmatprep.subr.mxu0 0.0
          %285 = vmatpush1.msra.mxu0 0.0
          %286 = vmatprep.subr.mxu0 0.0
          %287 = vmatpush1.msra.mxu0 0.0
          %288 = vmatprep.subr.mxu0 0.0
          %289 = vmatpush1.msra.mxu0 0.0
          %290 = vmatprep.subr.mxu0 0.0
          %291 = vmatpush1.msra.mxu0 0.0
          %292 = vmatprep.subr.mxu0 0.0
          %293 = vmatpush1.msra.mxu0 0.0
          %294 = vmatprep.subr.mxu0 0.0
          %295 = vmatpush1.msra.mxu0 0.0
          %296 = vmatprep.subr.mxu0 0.0
          %297 = vmatpush1.msra.mxu0 0.0
          %298 = vmatprep.subr.mxu0 0.0
          %299 = vmatpush1.msra.mxu0 0.0
          %300 = vmatprep.subr.mxu0 0.0
          %301 = vmatpush1.msra.mxu0 0.0
          %302 = vmatprep.subr.mxu0 0.0
          %303 = vmatpush1.msra.mxu0 0.0
          %304 = vmatprep.subr.mxu0 0.0
          %305 = vmatpush1.msra.mxu0 0.0
          %306 = vmatprep.subr.mxu0 0.0
          %307 = vmatpush1.msra.mxu0 0.0
          %308 = vmatprep.subr.mxu0 0.0
          %309 = vmatpush1.msra.mxu0 0.0
          %310 = vmatprep.subr.mxu0 0.0
          %311 = vmatpush1.msra.mxu0 0.0
          %312 = vmatprep.subr.mxu0 0.0
          %313 = vmatpush1.msra.mxu0 0.0
          %314 = vmatprep.subr.mxu0 0.0
          %315 = vmatpush1.msra.mxu0 0.0
          %316 = vmatprep.mubr.f32.mxu0 0.0
          %317 = vmatmul.mubr.f32.gmra.mrb[0].mxu0 %v225
          %v318 = vpop.f32.mrb[0].mxu0
          %v319 = vadd.f32 0.0, %v318
          %v320 = vpop.f32.mrb[0].mxu0
          %321 = vmatprep.mubr.f32.mxu0 0.0
          %322 = vmatmul.mubr.f32.gmra.mrb[0].mxu0 %v228
          %v323 = vpop.f32.mrb[0].mxu0
          %v324 = vadd.f32 0.0, %v323
          %v325 = vpop.f32.mrb[0].mxu0
          %326 = vmatprep.mubr.f32.mxu0 0.0
          %327 = vmatmul.mubr.f32.gmra.mrb[0].mxu0 %v231
          %v328 = vpop.f32.mrb[0].mxu0
          %v329 = vadd.f32 0.0, %v328
          %v330 = vpop.f32.mrb[0].mxu0
          %331 = vmatprep.mubr.f32.mxu0 0.0
          %332 = vmatmul.mubr.f32.gmra.mrb[0].mxu0 %v234
          %v333 = vpop.f32.mrb[0].mxu0
          %v334 = vadd.f32 0.0, %v333
          %v335 = vpop.f32.mrb[0].mxu0
          %336 = vmatprep.mubr.f32.mxu0 0.0
          %337 = vmatmul.mubr.f32.gmra.mrb[0].mxu0 %v237
          %v338 = vpop.f32.mrb[0].mxu0
          %v339 = vadd.f32 0.0, %v338
          %v340 = vpop.f32.mrb[0].mxu0
          %341 = vmatprep.mubr.f32.mxu0 0.0
          %342 = vmatmul.mubr.f32.gmra.mrb[0].mxu0 %v240
          %v343 = vpop.f32.mrb[0].mxu0
          %v344 = vadd.f32 0.0, %v343
          %v345 = vpop.f32.mrb[0].mxu0
          %346 = vmatprep.mubr.f32.mxu0 0.0
          %347 = vmatmul.mubr.f32.gmra.mrb[0].mxu0 %v243
          %v348 = vpop.f32.mrb[0].mxu0
          %v349 = vadd.f32 0.0, %v348
          %v350 = vpop.f32.mrb[0].mxu0
          %351 = vmatprep.mubr.f32.mxu0 0.0
          %352 = vmatmul.mubr.f32.gmra.mrb[0].mxu0 %v246
          %v353 = vpop.f32.mrb[0].mxu0
          %v354 = vadd.f32 0.0, %v353
          %v355 = vpop.f32.mrb[0].mxu0
          %356 = vdwg.mxu0
          %357 = vst.msk [vmem:[#allocation3] sm:$0xff] %vm223, %v319
          %358 = vst.msk [vmem:[#allocation3 + $0x8] sm:$0xff] %vm223, %v324
          %359 = vst.msk [vmem:[#allocation3 + $0x10] sm:$0xff] %vm223, %v329
          %360 = vst.msk [vmem:[#allocation3 + $0x18] sm:$0xff] %vm223, %v334
          %361 = vst.msk [vmem:[#allocation3 + $0x20] sm:$0xff] %vm223, %v339
          %362 = vst.msk [vmem:[#allocation3 + $0x28] sm:$0xff] %vm223, %v344
          %363 = vst.msk [vmem:[#allocation3 + $0x30] sm:$0xff] %vm223, %v349
          %364 = vst.msk [vmem:[#allocation3 + $0x38] sm:$0xff] %vm223, %v354
          %373 = vrot.lane.b32.xlu0 %v319, 124
          %v374 = vpop.permute.xlu0 %373
          %375 = vrot.lane.b32.xlu0 %v324, 124
          %v376 = vpop.permute.xlu0 %375
          %377 = vrot.lane.b32.xlu0 %v329, 124
          %v378 = vpop.permute.xlu0 %377
          %379 = vrot.lane.b32.xlu0 %v334, 124
          %v380 = vpop.permute.xlu0 %379
          %381 = vrot.lane.b32.xlu0 %v339, 124
          %v382 = vpop.permute.xlu0 %381
          %383 = vrot.lane.b32.xlu0 %v344, 124
          %v384 = vpop.permute.xlu0 %383
          %385 = vrot.lane.b32.xlu0 %v349, 124
          %v386 = vpop.permute.xlu0 %385
          %387 = vrot.lane.b32.xlu0 %v354, 124
          %v388 = vpop.permute.xlu0 %387
          %397 = vst.msk [vmem:[#allocation2] sm:$0xff] %vm223, %v374
          %398 = vst.msk [vmem:[#allocation2 + $0x8] sm:$0xff] %vm223, %v376
          %399 = vst.msk [vmem:[#allocation2 + $0x10] sm:$0xff] %vm223, %v378
          %400 = vst.msk [vmem:[#allocation2 + $0x18] sm:$0xff] %vm223, %v380
          %401 = vst.msk [vmem:[#allocation2 + $0x20] sm:$0xff] %vm223, %v382
          %402 = vst.msk [vmem:[#allocation2 + $0x28] sm:$0xff] %vm223, %v384
          %403 = vst.msk [vmem:[#allocation2 + $0x30] sm:$0xff] %vm223, %v386
          %404 = vst.msk [vmem:[#allocation2 + $0x38] sm:$0xff] %vm223, %v388
          %405 = vrot.lane.b32.xlu0 %v319, 120
          %v406 = vpop.permute.xlu0 %405
          %407 = vrot.lane.b32.xlu0 %v324, 120
          %v408 = vpop.permute.xlu0 %407
          %409 = vrot.lane.b32.xlu0 %v329, 120
          %v410 = vpop.permute.xlu0 %409
          %411 = vrot.lane.b32.xlu0 %v334, 120
          %v412 = vpop.permute.xlu0 %411
          %413 = vrot.lane.b32.xlu0 %v339, 120
          %v414 = vpop.permute.xlu0 %413
          %415 = vrot.lane.b32.xlu0 %v344, 120
          %v416 = vpop.permute.xlu0 %415
          %417 = vrot.lane.b32.xlu0 %v349, 120
          %v418 = vpop.permute.xlu0 %417
          %419 = vrot.lane.b32.xlu0 %v354, 120
          %v420 = vpop.permute.xlu0 %419
          %429 = vst.msk [vmem:[#allocation4] sm:$0xff] %vm223, %v406
          %430 = vst.msk [vmem:[#allocation4 + $0x8] sm:$0xff] %vm223, %v408
          %431 = vst.msk [vmem:[#allocation4 + $0x10] sm:$0xff] %vm223, %v410
          %432 = vst.msk [vmem:[#allocation4 + $0x18] sm:$0xff] %vm223, %v412
          %433 = vst.msk [vmem:[#allocation4 + $0x20] sm:$0xff] %vm223, %v414
          %434 = vst.msk [vmem:[#allocation4 + $0x28] sm:$0xff] %vm223, %v416
          %435 = vst.msk [vmem:[#allocation4 + $0x30] sm:$0xff] %vm223, %v418
          %436 = vst.msk [vmem:[#allocation4 + $0x38] sm:$0xff] %vm223, %v420
        $region40: #{tpu_custom_call.1} parent=35 // pred_fallthru
          _
        %s437 = smul.u32 %s23, 8
        %s438 = scalar_lea.vmem [#allocation2], %s437
        %v439 = vld [vmem:[%s438] sm:$0xff]
        %v440 = vld [vmem:[%s438 + $0x8] sm:$0xff]
        %v441 = vld [vmem:[%s438 + $0x10] sm:$0xff]
        %v442 = vld [vmem:[%s438 + $0x18] sm:$0xff]
        %v443 = vld [vmem:[%s438 + $0x20] sm:$0xff]
        %v444 = vld [vmem:[%s438 + $0x28] sm:$0xff]
        %v445 = vld [vmem:[%s438 + $0x30] sm:$0xff]
        %v446 = vld [vmem:[%s438 + $0x38] sm:$0xff]
        %v447 = vld [vmem:[#allocation3] sm:$0xff]
        %v448 = vld [vmem:[#allocation3 + $0x8] sm:$0xff]
        %v449 = vld [vmem:[#allocation3 + $0x10] sm:$0xff]
        %v450 = vld [vmem:[#allocation3 + $0x18] sm:$0xff]
        %v451 = vld [vmem:[#allocation3 + $0x20] sm:$0xff]
        %v452 = vld [vmem:[#allocation3 + $0x28] sm:$0xff]
        %v453 = vld [vmem:[#allocation3 + $0x30] sm:$0xff]
        %v454 = vld [vmem:[#allocation3 + $0x38] sm:$0xff]
        %v455 = vld [vmem:[#allocation4] sm:$0xff]
        %v456 = vld [vmem:[#allocation4 + $0x8] sm:$0xff]
        %v457 = vld [vmem:[#allocation4 + $0x10] sm:$0xff]
        %v458 = vld [vmem:[#allocation4 + $0x18] sm:$0xff]
        %v459 = vld [vmem:[#allocation4 + $0x20] sm:$0xff]
        %v460 = vld [vmem:[#allocation4 + $0x28] sm:$0xff]
        %v461 = vld [vmem:[#allocation4 + $0x30] sm:$0xff]
        %v462 = vld [vmem:[#allocation4 + $0x38] sm:$0xff]
        %vm463 = vcmask 31744
        %v465 = vsel %vm463, %v439, 0
        %v468 = vsel %vm463, %v447, 0
        %470 = vmatprep.subr.mxu0 0.0
        %471 = vmatpush1.xpose.msra.mxu0 %v468
        %472 = vmatprep.subr.mxu0 0.0
        %473 = vmatpush1.xpose.msra.mxu0 0.0
        %474 = vmatprep.subr.mxu0 0.0
        %475 = vmatpush1.xpose.msra.mxu0 0.0
        %476 = vmatprep.subr.mxu0 0.0
        %477 = vmatpush1.xpose.msra.mxu0 0.0
        %478 = vmatprep.subr.mxu0 0.0
        %479 = vmatpush1.xpose.msra.mxu0 0.0
        %480 = vmatprep.subr.mxu0 0.0
        %481 = vmatpush1.xpose.msra.mxu0 0.0
        %482 = vmatprep.subr.mxu0 0.0
        %483 = vmatpush1.xpose.msra.mxu0 0.0
        %484 = vmatprep.subr.mxu0 0.0
        %485 = vmatpush1.xpose.msra.mxu0 0.0
        %486 = vmatprep.subr.mxu0 0.0
        %487 = vmatpush1.xpose.msra.mxu0 0.0
        %488 = vmatprep.subr.mxu0 0.0
        %489 = vmatpush1.xpose.msra.mxu0 0.0
        %490 = vmatprep.subr.mxu0 0.0
        %491 = vmatpush1.xpose.msra.mxu0 0.0
        %492 = vmatprep.subr.mxu0 0.0
        %493 = vmatpush1.xpose.msra.mxu0 0.0
        %494 = vmatprep.subr.mxu0 0.0
        %495 = vmatpush1.xpose.msra.mxu0 0.0
        %496 = vmatprep.subr.mxu0 0.0
        %497 = vmatpush1.xpose.msra.mxu0 0.0
        %498 = vmatprep.subr.mxu0 0.0
        %499 = vmatpush1.xpose.msra.mxu0 0.0
        %500 = vmatprep.subr.mxu0 0.0
        %501 = vmatpush1.xpose.msra.mxu0 0.0
        %502 = vmatprep.subr.mxu0 0.0
        %503 = vmatpush1.xpose.msra.mxu0 0.0
        %504 = vmatprep.subr.mxu0 0.0
        %505 = vmatpush1.xpose.msra.mxu0 0.0
        %506 = vmatprep.subr.mxu0 0.0
        %507 = vmatpush1.xpose.msra.mxu0 0.0
        %508 = vmatprep.subr.mxu0 0.0
        %509 = vmatpush1.xpose.msra.mxu0 0.0
        %510 = vmatprep.subr.mxu0 0.0
        %511 = vmatpush1.xpose.msra.mxu0 0.0
        %512 = vmatprep.subr.mxu0 0.0
        %513 = vmatpush1.xpose.msra.mxu0 0.0
        %514 = vmatprep.subr.mxu0 0.0
        %515 = vmatpush1.xpose.msra.mxu0 0.0
        %516 = vmatprep.subr.mxu0 0.0
        %517 = vmatpush1.xpose.msra.mxu0 0.0
        %518 = vmatprep.subr.mxu0 0.0
        %519 = vmatpush1.xpose.msra.mxu0 0.0
        %520 = vmatprep.subr.mxu0 0.0
        %521 = vmatpush1.xpose.msra.mxu0 0.0
        %522 = vmatprep.subr.mxu0 0.0
        %523 = vmatpush1.xpose.msra.mxu0 0.0
        %524 = vmatprep.subr.mxu0 0.0
        %525 = vmatpush1.xpose.msra.mxu0 0.0
        %526 = vmatprep.subr.mxu0 0.0
        %527 = vmatpush1.xpose.msra.mxu0 0.0
        %528 = vmatprep.subr.mxu0 0.0
        %529 = vmatpush1.xpose.msra.mxu0 0.0
        %530 = vmatprep.subr.mxu0 0.0
        %531 = vmatpush1.xpose.msra.mxu0 0.0
        %532 = vmatprep.subr.mxu0 0.0
        %533 = vmatpush1.xpose.msra.mxu0 0.0
        %534 = vmatprep.mubr.f32.mxu0 0.0
        %535 = vmatmul.mubr.f32.gmra.mrb[0].mxu0 %v465
        %v536 = vpop.f32.mrb[0].mxu0
        %v537 = vadd.f32 0.0, %v536
        %v538 = vpop.f32.mrb[0].mxu0
        %539 = vdwg.mxu0
        %v541 = vsel %vm463, %v440, 0
        %v544 = vsel %vm463, %v448, 0
        %546 = vmatprep.subr.mxu0 0.0
        %547 = vmatpush1.xpose.msra.mxu0 %v544
        %548 = vmatprep.subr.mxu0 0.0
        %549 = vmatpush1.xpose.msra.mxu0 0.0
        %550 = vmatprep.subr.mxu0 0.0
        %551 = vmatpush1.xpose.msra.mxu0 0.0
        %552 = vmatprep.subr.mxu0 0.0
        %553 = vmatpush1.xpose.msra.mxu0 0.0
        %554 = vmatprep.subr.mxu0 0.0
        %555 = vmatpush1.xpose.msra.mxu0 0.0
        %556 = vmatprep.subr.mxu0 0.0
        %557 = vmatpush1.xpose.msra.mxu0 0.0
        %558 = vmatprep.subr.mxu0 0.0
        %559 = vmatpush1.xpose.msra.mxu0 0.0
        %560 = vmatprep.subr.mxu0 0.0
        %561 = vmatpush1.xpose.msra.mxu0 0.0
        %562 = vmatprep.subr.mxu0 0.0
        %563 = vmatpush1.xpose.msra.mxu0 0.0
        %564 = vmatprep.subr.mxu0 0.0
        %565 = vmatpush1.xpose.msra.mxu0 0.0
        %566 = vmatprep.subr.mxu0 0.0
        %567 = vmatpush1.xpose.msra.mxu0 0.0
        %568 = vmatprep.subr.mxu0 0.0
        %569 = vmatpush1.xpose.msra.mxu0 0.0
        %570 = vmatprep.subr.mxu0 0.0
        %571 = vmatpush1.xpose.msra.mxu0 0.0
        %572 = vmatprep.subr.mxu0 0.0
        %573 = vmatpush1.xpose.msra.mxu0 0.0
        %574 = vmatprep.subr.mxu0 0.0
        %575 = vmatpush1.xpose.msra.mxu0 0.0
        %576 = vmatprep.subr.mxu0 0.0
        %577 = vmatpush1.xpose.msra.mxu0 0.0
        %578 = vmatprep.subr.mxu0 0.0
        %579 = vmatpush1.xpose.msra.mxu0 0.0
        %580 = vmatprep.subr.mxu0 0.0
        %581 = vmatpush1.xpose.msra.mxu0 0.0
        %582 = vmatprep.subr.mxu0 0.0
        %583 = vmatpush1.xpose.msra.mxu0 0.0
        %584 = vmatprep.subr.mxu0 0.0
        %585 = vmatpush1.xpose.msra.mxu0 0.0
        %586 = vmatprep.subr.mxu0 0.0
        %587 = vmatpush1.xpose.msra.mxu0 0.0
        %588 = vmatprep.subr.mxu0 0.0
        %589 = vmatpush1.xpose.msra.mxu0 0.0
        %590 = vmatprep.subr.mxu0 0.0
        %591 = vmatpush1.xpose.msra.mxu0 0.0
        %592 = vmatprep.subr.mxu0 0.0
        %593 = vmatpush1.xpose.msra.mxu0 0.0
        %594 = vmatprep.subr.mxu0 0.0
        %595 = vmatpush1.xpose.msra.mxu0 0.0
        %596 = vmatprep.subr.mxu0 0.0
        %597 = vmatpush1.xpose.msra.mxu0 0.0
        %598 = vmatprep.subr.mxu0 0.0
        %599 = vmatpush1.xpose.msra.mxu0 0.0
        %600 = vmatprep.subr.mxu0 0.0
        %601 = vmatpush1.xpose.msra.mxu0 0.0
        %602 = vmatprep.subr.mxu0 0.0
        %603 = vmatpush1.xpose.msra.mxu0 0.0
        %604 = vmatprep.subr.mxu0 0.0
        %605 = vmatpush1.xpose.msra.mxu0 0.0
        %606 = vmatprep.subr.mxu0 0.0
        %607 = vmatpush1.xpose.msra.mxu0 0.0
        %608 = vmatprep.subr.mxu0 0.0
        %609 = vmatpush1.xpose.msra.mxu0 0.0
        %610 = vmatprep.mubr.f32.mxu0 0.0
        %611 = vmatmul.mubr.f32.gmra.mrb[0].mxu0 %v541
        %v612 = vpop.f32.mrb[0].mxu0
        %v613 = vadd.f32 0.0, %v612
        %v614 = vpop.f32.mrb[0].mxu0
        %615 = vdwg.mxu0
        %v617 = vsel %vm463, %v441, 0
        %v620 = vsel %vm463, %v449, 0
        %622 = vmatprep.subr.mxu0 0.0
        %623 = vmatpush1.xpose.msra.mxu0 %v620
        %624 = vmatprep.subr.mxu0 0.0
        %625 = vmatpush1.xpose.msra.mxu0 0.0
        %626 = vmatprep.subr.mxu0 0.0
        %627 = vmatpush1.xpose.msra.mxu0 0.0
        %628 = vmatprep.subr.mxu0 0.0
        %629 = vmatpush1.xpose.msra.mxu0 0.0
        %630 = vmatprep.subr.mxu0 0.0
        %631 = vmatpush1.xpose.msra.mxu0 0.0
        %632 = vmatprep.subr.mxu0 0.0
        %633 = vmatpush1.xpose.msra.mxu0 0.0
        %634 = vmatprep.subr.mxu0 0.0
        %635 = vmatpush1.xpose.msra.mxu0 0.0
        %636 = vmatprep.subr.mxu0 0.0
        %637 = vmatpush1.xpose.msra.mxu0 0.0
        %638 = vmatprep.subr.mxu0 0.0
        %639 = vmatpush1.xpose.msra.mxu0 0.0
        %640 = vmatprep.subr.mxu0 0.0
        %641 = vmatpush1.xpose.msra.mxu0 0.0
        %642 = vmatprep.subr.mxu0 0.0
        %643 = vmatpush1.xpose.msra.mxu0 0.0
        %644 = vmatprep.subr.mxu0 0.0
        %645 = vmatpush1.xpose.msra.mxu0 0.0
        %646 = vmatprep.subr.mxu0 0.0
        %647 = vmatpush1.xpose.msra.mxu0 0.0
        %648 = vmatprep.subr.mxu0 0.0
        %649 = vmatpush1.xpose.msra.mxu0 0.0
        %650 = vmatprep.subr.mxu0 0.0
        %651 = vmatpush1.xpose.msra.mxu0 0.0
        %652 = vmatprep.subr.mxu0 0.0
        %653 = vmatpush1.xpose.msra.mxu0 0.0
        %654 = vmatprep.subr.mxu0 0.0
        %655 = vmatpush1.xpose.msra.mxu0 0.0
        %656 = vmatprep.subr.mxu0 0.0
        %657 = vmatpush1.xpose.msra.mxu0 0.0
        %658 = vmatprep.subr.mxu0 0.0
        %659 = vmatpush1.xpose.msra.mxu0 0.0
        %660 = vmatprep.subr.mxu0 0.0
        %661 = vmatpush1.xpose.msra.mxu0 0.0
        %662 = vmatprep.subr.mxu0 0.0
        %663 = vmatpush1.xpose.msra.mxu0 0.0
        %664 = vmatprep.subr.mxu0 0.0
        %665 = vmatpush1.xpose.msra.mxu0 0.0
        %666 = vmatprep.subr.mxu0 0.0
        %667 = vmatpush1.xpose.msra.mxu0 0.0
        %668 = vmatprep.subr.mxu0 0.0
        %669 = vmatpush1.xpose.msra.mxu0 0.0
        %670 = vmatprep.subr.mxu0 0.0
        %671 = vmatpush1.xpose.msra.mxu0 0.0
        %672 = vmatprep.subr.mxu0 0.0
        %673 = vmatpush1.xpose.msra.mxu0 0.0
        %674 = vmatprep.subr.mxu0 0.0
        %675 = vmatpush1.xpose.msra.mxu0 0.0
        %676 = vmatprep.subr.mxu0 0.0
        %677 = vmatpush1.xpose.msra.mxu0 0.0
        %678 = vmatprep.subr.mxu0 0.0
        %679 = vmatpush1.xpose.msra.mxu0 0.0
        %680 = vmatprep.subr.mxu0 0.0
        %681 = vmatpush1.xpose.msra.mxu0 0.0
        %682 = vmatprep.subr.mxu0 0.0
        %683 = vmatpush1.xpose.msra.mxu0 0.0
        %684 = vmatprep.subr.mxu0 0.0
        %685 = vmatpush1.xpose.msra.mxu0 0.0
        %686 = vmatprep.mubr.f32.mxu0 0.0
        %687 = vmatmul.mubr.f32.gmra.mrb[0].mxu0 %v617
        %v688 = vpop.f32.mrb[0].mxu0
        %v689 = vadd.f32 0.0, %v688
        %v690 = vpop.f32.mrb[0].mxu0
        %691 = vdwg.mxu0
        %v693 = vsel %vm463, %v442, 0
        %v696 = vsel %vm463, %v450, 0
        %698 = vmatprep.subr.mxu0 0.0
        %699 = vmatpush1.xpose.msra.mxu0 %v696
        %700 = vmatprep.subr.mxu0 0.0
        %701 = vmatpush1.xpose.msra.mxu0 0.0
        %702 = vmatprep.subr.mxu0 0.0
        %703 = vmatpush1.xpose.msra.mxu0 0.0
        %704 = vmatprep.subr.mxu0 0.0
        %705 = vmatpush1.xpose.msra.mxu0 0.0
        %706 = vmatprep.subr.mxu0 0.0
        %707 = vmatpush1.xpose.msra.mxu0 0.0
        %708 = vmatprep.subr.mxu0 0.0
        %709 = vmatpush1.xpose.msra.mxu0 0.0
        %710 = vmatprep.subr.mxu0 0.0
        %711 = vmatpush1.xpose.msra.mxu0 0.0
        %712 = vmatprep.subr.mxu0 0.0
        %713 = vmatpush1.xpose.msra.mxu0 0.0
        %714 = vmatprep.subr.mxu0 0.0
        %715 = vmatpush1.xpose.msra.mxu0 0.0
        %716 = vmatprep.subr.mxu0 0.0
        %717 = vmatpush1.xpose.msra.mxu0 0.0
        %718 = vmatprep.subr.mxu0 0.0
        %719 = vmatpush1.xpose.msra.mxu0 0.0
        %720 = vmatprep.subr.mxu0 0.0
        %721 = vmatpush1.xpose.msra.mxu0 0.0
        %722 = vmatprep.subr.mxu0 0.0
        %723 = vmatpush1.xpose.msra.mxu0 0.0
        %724 = vmatprep.subr.mxu0 0.0
        %725 = vmatpush1.xpose.msra.mxu0 0.0
        %726 = vmatprep.subr.mxu0 0.0
        %727 = vmatpush1.xpose.msra.mxu0 0.0
        %728 = vmatprep.subr.mxu0 0.0
        %729 = vmatpush1.xpose.msra.mxu0 0.0
        %730 = vmatprep.subr.mxu0 0.0
        %731 = vmatpush1.xpose.msra.mxu0 0.0
        %732 = vmatprep.subr.mxu0 0.0
        %733 = vmatpush1.xpose.msra.mxu0 0.0
        %734 = vmatprep.subr.mxu0 0.0
        %735 = vmatpush1.xpose.msra.mxu0 0.0
        %736 = vmatprep.subr.mxu0 0.0
        %737 = vmatpush1.xpose.msra.mxu0 0.0
        %738 = vmatprep.subr.mxu0 0.0
        %739 = vmatpush1.xpose.msra.mxu0 0.0
        %740 = vmatprep.subr.mxu0 0.0
        %741 = vmatpush1.xpose.msra.mxu0 0.0
        %742 = vmatprep.subr.mxu0 0.0
        %743 = vmatpush1.xpose.msra.mxu0 0.0
        %744 = vmatprep.subr.mxu0 0.0
        %745 = vmatpush1.xpose.msra.mxu0 0.0
        %746 = vmatprep.subr.mxu0 0.0
        %747 = vmatpush1.xpose.msra.mxu0 0.0
        %748 = vmatprep.subr.mxu0 0.0
        %749 = vmatpush1.xpose.msra.mxu0 0.0
        %750 = vmatprep.subr.mxu0 0.0
        %751 = vmatpush1.xpose.msra.mxu0 0.0
        %752 = vmatprep.subr.mxu0 0.0
        %753 = vmatpush1.xpose.msra.mxu0 0.0
        %754 = vmatprep.subr.mxu0 0.0
        %755 = vmatpush1.xpose.msra.mxu0 0.0
        %756 = vmatprep.subr.mxu0 0.0
        %757 = vmatpush1.xpose.msra.mxu0 0.0
        %758 = vmatprep.subr.mxu0 0.0
        %759 = vmatpush1.xpose.msra.mxu0 0.0
        %760 = vmatprep.subr.mxu0 0.0
        %761 = vmatpush1.xpose.msra.mxu0 0.0
        %762 = vmatprep.mubr.f32.mxu0 0.0
        %763 = vmatmul.mubr.f32.gmra.mrb[0].mxu0 %v693
        %v764 = vpop.f32.mrb[0].mxu0
        %v765 = vadd.f32 0.0, %v764
        %v766 = vpop.f32.mrb[0].mxu0
        %767 = vdwg.mxu0
        %v769 = vsel %vm463, %v443, 0
        %v772 = vsel %vm463, %v451, 0
        %774 = vmatprep.subr.mxu0 0.0
        %775 = vmatpush1.xpose.msra.mxu0 %v772
        %776 = vmatprep.subr.mxu0 0.0
        %777 = vmatpush1.xpose.msra.mxu0 0.0
        %778 = vmatprep.subr.mxu0 0.0
        %779 = vmatpush1.xpose.msra.mxu0 0.0
        %780 = vmatprep.subr.mxu0 0.0
        %781 = vmatpush1.xpose.msra.mxu0 0.0
        %782 = vmatprep.subr.mxu0 0.0
        %783 = vmatpush1.xpose.msra.mxu0 0.0
        %784 = vmatprep.subr.mxu0 0.0
        %785 = vmatpush1.xpose.msra.mxu0 0.0
        %786 = vmatprep.subr.mxu0 0.0
        %787 = vmatpush1.xpose.msra.mxu0 0.0
        %788 = vmatprep.subr.mxu0 0.0
        %789 = vmatpush1.xpose.msra.mxu0 0.0
        %790 = vmatprep.subr.mxu0 0.0
        %791 = vmatpush1.xpose.msra.mxu0 0.0
        %792 = vmatprep.subr.mxu0 0.0
        %793 = vmatpush1.xpose.msra.mxu0 0.0
        %794 = vmatprep.subr.mxu0 0.0
        %795 = vmatpush1.xpose.msra.mxu0 0.0
        %796 = vmatprep.subr.mxu0 0.0
        %797 = vmatpush1.xpose.msra.mxu0 0.0
        %798 = vmatprep.subr.mxu0 0.0
        %799 = vmatpush1.xpose.msra.mxu0 0.0
        %800 = vmatprep.subr.mxu0 0.0
        %801 = vmatpush1.xpose.msra.mxu0 0.0
        %802 = vmatprep.subr.mxu0 0.0
        %803 = vmatpush1.xpose.msra.mxu0 0.0
        %804 = vmatprep.subr.mxu0 0.0
        %805 = vmatpush1.xpose.msra.mxu0 0.0
        %806 = vmatprep.subr.mxu0 0.0
        %807 = vmatpush1.xpose.msra.mxu0 0.0
        %808 = vmatprep.subr.mxu0 0.0
        %809 = vmatpush1.xpose.msra.mxu0 0.0
        %810 = vmatprep.subr.mxu0 0.0
        %811 = vmatpush1.xpose.msra.mxu0 0.0
        %812 = vmatprep.subr.mxu0 0.0
        %813 = vmatpush1.xpose.msra.mxu0 0.0
        %814 = vmatprep.subr.mxu0 0.0
        %815 = vmatpush1.xpose.msra.mxu0 0.0
        %816 = vmatprep.subr.mxu0 0.0
        %817 = vmatpush1.xpose.msra.mxu0 0.0
        %818 = vmatprep.subr.mxu0 0.0
        %819 = vmatpush1.xpose.msra.mxu0 0.0
        %820 = vmatprep.subr.mxu0 0.0
        %821 = vmatpush1.xpose.msra.mxu0 0.0
        %822 = vmatprep.subr.mxu0 0.0
        %823 = vmatpush1.xpose.msra.mxu0 0.0
        %824 = vmatprep.subr.mxu0 0.0
        %825 = vmatpush1.xpose.msra.mxu0 0.0
        %826 = vmatprep.subr.mxu0 0.0
        %827 = vmatpush1.xpose.msra.mxu0 0.0
        %828 = vmatprep.subr.mxu0 0.0
        %829 = vmatpush1.xpose.msra.mxu0 0.0
        %830 = vmatprep.subr.mxu0 0.0
        %831 = vmatpush1.xpose.msra.mxu0 0.0
        %832 = vmatprep.subr.mxu0 0.0
        %833 = vmatpush1.xpose.msra.mxu0 0.0
        %834 = vmatprep.subr.mxu0 0.0
        %835 = vmatpush1.xpose.msra.mxu0 0.0
        %836 = vmatprep.subr.mxu0 0.0
        %837 = vmatpush1.xpose.msra.mxu0 0.0
        %838 = vmatprep.mubr.f32.mxu0 0.0
        %839 = vmatmul.mubr.f32.gmra.mrb[0].mxu0 %v769
        %v840 = vpop.f32.mrb[0].mxu0
        %v841 = vadd.f32 0.0, %v840
        %v842 = vpop.f32.mrb[0].mxu0
        %843 = vdwg.mxu0
        %v845 = vsel %vm463, %v444, 0
        %v848 = vsel %vm463, %v452, 0
        %850 = vmatprep.subr.mxu0 0.0
        %851 = vmatpush1.xpose.msra.mxu0 %v848
        %852 = vmatprep.subr.mxu0 0.0
        %853 = vmatpush1.xpose.msra.mxu0 0.0
        %854 = vmatprep.subr.mxu0 0.0
        %855 = vmatpush1.xpose.msra.mxu0 0.0
        %856 = vmatprep.subr.mxu0 0.0
        %857 = vmatpush1.xpose.msra.mxu0 0.0
        %858 = vmatprep.subr.mxu0 0.0
        %859 = vmatpush1.xpose.msra.mxu0 0.0
        %860 = vmatprep.subr.mxu0 0.0
        %861 = vmatpush1.xpose.msra.mxu0 0.0
        %862 = vmatprep.subr.mxu0 0.0
        %863 = vmatpush1.xpose.msra.mxu0 0.0
        %864 = vmatprep.subr.mxu0 0.0
        %865 = vmatpush1.xpose.msra.mxu0 0.0
        %866 = vmatprep.subr.mxu0 0.0
        %867 = vmatpush1.xpose.msra.mxu0 0.0
        %868 = vmatprep.subr.mxu0 0.0
        %869 = vmatpush1.xpose.msra.mxu0 0.0
        %870 = vmatprep.subr.mxu0 0.0
        %871 = vmatpush1.xpose.msra.mxu0 0.0
        %872 = vmatprep.subr.mxu0 0.0
        %873 = vmatpush1.xpose.msra.mxu0 0.0
        %874 = vmatprep.subr.mxu0 0.0
        %875 = vmatpush1.xpose.msra.mxu0 0.0
        %876 = vmatprep.subr.mxu0 0.0
        %877 = vmatpush1.xpose.msra.mxu0 0.0
        %878 = vmatprep.subr.mxu0 0.0
        %879 = vmatpush1.xpose.msra.mxu0 0.0
        %880 = vmatprep.subr.mxu0 0.0
        %881 = vmatpush1.xpose.msra.mxu0 0.0
        %882 = vmatprep.subr.mxu0 0.0
        %883 = vmatpush1.xpose.msra.mxu0 0.0
        %884 = vmatprep.subr.mxu0 0.0
        %885 = vmatpush1.xpose.msra.mxu0 0.0
        %886 = vmatprep.subr.mxu0 0.0
        %887 = vmatpush1.xpose.msra.mxu0 0.0
        %888 = vmatprep.subr.mxu0 0.0
        %889 = vmatpush1.xpose.msra.mxu0 0.0
        %890 = vmatprep.subr.mxu0 0.0
        %891 = vmatpush1.xpose.msra.mxu0 0.0
        %892 = vmatprep.subr.mxu0 0.0
        %893 = vmatpush1.xpose.msra.mxu0 0.0
        %894 = vmatprep.subr.mxu0 0.0
        %895 = vmatpush1.xpose.msra.mxu0 0.0
        %896 = vmatprep.subr.mxu0 0.0
        %897 = vmatpush1.xpose.msra.mxu0 0.0
        %898 = vmatprep.subr.mxu0 0.0
        %899 = vmatpush1.xpose.msra.mxu0 0.0
        %900 = vmatprep.subr.mxu0 0.0
        %901 = vmatpush1.xpose.msra.mxu0 0.0
        %902 = vmatprep.subr.mxu0 0.0
        %903 = vmatpush1.xpose.msra.mxu0 0.0
        %904 = vmatprep.subr.mxu0 0.0
        %905 = vmatpush1.xpose.msra.mxu0 0.0
        %906 = vmatprep.subr.mxu0 0.0
        %907 = vmatpush1.xpose.msra.mxu0 0.0
        %908 = vmatprep.subr.mxu0 0.0
        %909 = vmatpush1.xpose.msra.mxu0 0.0
        %910 = vmatprep.subr.mxu0 0.0
        %911 = vmatpush1.xpose.msra.mxu0 0.0
        %912 = vmatprep.subr.mxu0 0.0
        %913 = vmatpush1.xpose.msra.mxu0 0.0
        %914 = vmatprep.mubr.f32.mxu0 0.0
        %915 = vmatmul.mubr.f32.gmra.mrb[0].mxu0 %v845
        %v916 = vpop.f32.mrb[0].mxu0
        %v917 = vadd.f32 0.0, %v916
        %v918 = vpop.f32.mrb[0].mxu0
        %919 = vdwg.mxu0
        %v921 = vsel %vm463, %v445, 0
        %v924 = vsel %vm463, %v453, 0
        %926 = vmatprep.subr.mxu0 0.0
        %927 = vmatpush1.xpose.msra.mxu0 %v924
        %928 = vmatprep.subr.mxu0 0.0
        %929 = vmatpush1.xpose.msra.mxu0 0.0
        %930 = vmatprep.subr.mxu0 0.0
        %931 = vmatpush1.xpose.msra.mxu0 0.0
        %932 = vmatprep.subr.mxu0 0.0
        %933 = vmatpush1.xpose.msra.mxu0 0.0
        %934 = vmatprep.subr.mxu0 0.0
        %935 = vmatpush1.xpose.msra.mxu0 0.0
        %936 = vmatprep.subr.mxu0 0.0
        %937 = vmatpush1.xpose.msra.mxu0 0.0
        %938 = vmatprep.subr.mxu0 0.0
        %939 = vmatpush1.xpose.msra.mxu0 0.0
        %940 = vmatprep.subr.mxu0 0.0
        %941 = vmatpush1.xpose.msra.mxu0 0.0
        %942 = vmatprep.subr.mxu0 0.0
        %943 = vmatpush1.xpose.msra.mxu0 0.0
        %944 = vmatprep.subr.mxu0 0.0
        %945 = vmatpush1.xpose.msra.mxu0 0.0
        %946 = vmatprep.subr.mxu0 0.0
        %947 = vmatpush1.xpose.msra.mxu0 0.0
        %948 = vmatprep.subr.mxu0 0.0
        %949 = vmatpush1.xpose.msra.mxu0 0.0
        %950 = vmatprep.subr.mxu0 0.0
        %951 = vmatpush1.xpose.msra.mxu0 0.0
        %952 = vmatprep.subr.mxu0 0.0
        %953 = vmatpush1.xpose.msra.mxu0 0.0
        %954 = vmatprep.subr.mxu0 0.0
        %955 = vmatpush1.xpose.msra.mxu0 0.0
        %956 = vmatprep.subr.mxu0 0.0
        %957 = vmatpush1.xpose.msra.mxu0 0.0
        %958 = vmatprep.subr.mxu0 0.0
        %959 = vmatpush1.xpose.msra.mxu0 0.0
        %960 = vmatprep.subr.mxu0 0.0
        %961 = vmatpush1.xpose.msra.mxu0 0.0
        %962 = vmatprep.subr.mxu0 0.0
        %963 = vmatpush1.xpose.msra.mxu0 0.0
        %964 = vmatprep.subr.mxu0 0.0
        %965 = vmatpush1.xpose.msra.mxu0 0.0
        %966 = vmatprep.subr.mxu0 0.0
        %967 = vmatpush1.xpose.msra.mxu0 0.0
        %968 = vmatprep.subr.mxu0 0.0
        %969 = vmatpush1.xpose.msra.mxu0 0.0
        %970 = vmatprep.subr.mxu0 0.0
        %971 = vmatpush1.xpose.msra.mxu0 0.0
        %972 = vmatprep.subr.mxu0 0.0
        %973 = vmatpush1.xpose.msra.mxu0 0.0
        %974 = vmatprep.subr.mxu0 0.0
        %975 = vmatpush1.xpose.msra.mxu0 0.0
        %976 = vmatprep.subr.mxu0 0.0
        %977 = vmatpush1.xpose.msra.mxu0 0.0
        %978 = vmatprep.subr.mxu0 0.0
        %979 = vmatpush1.xpose.msra.mxu0 0.0
        %980 = vmatprep.subr.mxu0 0.0
        %981 = vmatpush1.xpose.msra.mxu0 0.0
        %982 = vmatprep.subr.mxu0 0.0
        %983 = vmatpush1.xpose.msra.mxu0 0.0
        %984 = vmatprep.subr.mxu0 0.0
        %985 = vmatpush1.xpose.msra.mxu0 0.0
        %986 = vmatprep.subr.mxu0 0.0
        %987 = vmatpush1.xpose.msra.mxu0 0.0
        %988 = vmatprep.subr.mxu0 0.0
        %989 = vmatpush1.xpose.msra.mxu0 0.0
        %990 = vmatprep.mubr.f32.mxu0 0.0
        %991 = vmatmul.mubr.f32.gmra.mrb[0].mxu0 %v921
        %v992 = vpop.f32.mrb[0].mxu0
        %v993 = vadd.f32 0.0, %v992
        %v994 = vpop.f32.mrb[0].mxu0
        %995 = vdwg.mxu0
        %v997 = vsel %vm463, %v446, 0
        %v1000 = vsel %vm463, %v454, 0
        %1002 = vmatprep.subr.mxu0 0.0
        %1003 = vmatpush1.xpose.msra.mxu0 %v1000
        %1004 = vmatprep.subr.mxu0 0.0
        %1005 = vmatpush1.xpose.msra.mxu0 0.0
        %1006 = vmatprep.subr.mxu0 0.0
        %1007 = vmatpush1.xpose.msra.mxu0 0.0
        %1008 = vmatprep.subr.mxu0 0.0
        %1009 = vmatpush1.xpose.msra.mxu0 0.0
        %1010 = vmatprep.subr.mxu0 0.0
        %1011 = vmatpush1.xpose.msra.mxu0 0.0
        %1012 = vmatprep.subr.mxu0 0.0
        %1013 = vmatpush1.xpose.msra.mxu0 0.0
        %1014 = vmatprep.subr.mxu0 0.0
        %1015 = vmatpush1.xpose.msra.mxu0 0.0
        %1016 = vmatprep.subr.mxu0 0.0
        %1017 = vmatpush1.xpose.msra.mxu0 0.0
        %1018 = vmatprep.subr.mxu0 0.0
        %1019 = vmatpush1.xpose.msra.mxu0 0.0
        %1020 = vmatprep.subr.mxu0 0.0
        %1021 = vmatpush1.xpose.msra.mxu0 0.0
        %1022 = vmatprep.subr.mxu0 0.0
        %1023 = vmatpush1.xpose.msra.mxu0 0.0
        %1024 = vmatprep.subr.mxu0 0.0
        %1025 = vmatpush1.xpose.msra.mxu0 0.0
        %1026 = vmatprep.subr.mxu0 0.0
        %1027 = vmatpush1.xpose.msra.mxu0 0.0
        %1028 = vmatprep.subr.mxu0 0.0
        %1029 = vmatpush1.xpose.msra.mxu0 0.0
        %1030 = vmatprep.subr.mxu0 0.0
        %1031 = vmatpush1.xpose.msra.mxu0 0.0
        %1032 = vmatprep.subr.mxu0 0.0
        %1033 = vmatpush1.xpose.msra.mxu0 0.0
        %1034 = vmatprep.subr.mxu0 0.0
        %1035 = vmatpush1.xpose.msra.mxu0 0.0
        %1036 = vmatprep.subr.mxu0 0.0
        %1037 = vmatpush1.xpose.msra.mxu0 0.0
        %1038 = vmatprep.subr.mxu0 0.0
        %1039 = vmatpush1.xpose.msra.mxu0 0.0
        %1040 = vmatprep.subr.mxu0 0.0
        %1041 = vmatpush1.xpose.msra.mxu0 0.0
        %1042 = vmatprep.subr.mxu0 0.0
        %1043 = vmatpush1.xpose.msra.mxu0 0.0
        %1044 = vmatprep.subr.mxu0 0.0
        %1045 = vmatpush1.xpose.msra.mxu0 0.0
        %1046 = vmatprep.subr.mxu0 0.0
        %1047 = vmatpush1.xpose.msra.mxu0 0.0
        %1048 = vmatprep.subr.mxu0 0.0
        %1049 = vmatpush1.xpose.msra.mxu0 0.0
        %1050 = vmatprep.subr.mxu0 0.0
        %1051 = vmatpush1.xpose.msra.mxu0 0.0
        %1052 = vmatprep.subr.mxu0 0.0
        %1053 = vmatpush1.xpose.msra.mxu0 0.0
        %1054 = vmatprep.subr.mxu0 0.0
        %1055 = vmatpush1.xpose.msra.mxu0 0.0
        %1056 = vmatprep.subr.mxu0 0.0
        %1057 = vmatpush1.xpose.msra.mxu0 0.0
        %1058 = vmatprep.subr.mxu0 0.0
        %1059 = vmatpush1.xpose.msra.mxu0 0.0
        %1060 = vmatprep.subr.mxu0 0.0
        %1061 = vmatpush1.xpose.msra.mxu0 0.0
        %1062 = vmatprep.subr.mxu0 0.0
        %1063 = vmatpush1.xpose.msra.mxu0 0.0
        %1064 = vmatprep.subr.mxu0 0.0
        %1065 = vmatpush1.xpose.msra.mxu0 0.0
        %1066 = vmatprep.mubr.f32.mxu0 0.0
        %1067 = vmatmul.mubr.f32.gmra.mrb[0].mxu0 %v997
        %v1068 = vpop.f32.mrb[0].mxu0
        %v1069 = vadd.f32 0.0, %v1068
        %v1070 = vpop.f32.mrb[0].mxu0
        %1071 = vdwg.mxu0
        %vm1072 = vcmask 64512
        %v1073 = vsel %vm1072, %v537, -inf
        %1074 = vmax.xlane.f32.xlu0 %v1073
        %v1075 = vpop.xlane.xlu0 %1074
        %v1076 = vsel %vm1072, %v613, -inf
        %1077 = vmax.xlane.f32.xlu0 %v1076
        %v1078 = vpop.xlane.xlu0 %1077
        %v1079 = vsel %vm1072, %v689, -inf
        %1080 = vmax.xlane.f32.xlu0 %v1079
        %v1081 = vpop.xlane.xlu0 %1080
        %v1082 = vsel %vm1072, %v765, -inf
        %1083 = vmax.xlane.f32.xlu0 %v1082
        %v1084 = vpop.xlane.xlu0 %1083
        %v1085 = vsel %vm1072, %v841, -inf
        %1086 = vmax.xlane.f32.xlu0 %v1085
        %v1087 = vpop.xlane.xlu0 %1086
        %v1088 = vsel %vm1072, %v917, -inf
        %1089 = vmax.xlane.f32.xlu0 %v1088
        %v1090 = vpop.xlane.xlu0 %1089
        %v1091 = vsel %vm1072, %v993, -inf
        %1092 = vmax.xlane.f32.xlu0 %v1091
        %v1093 = vpop.xlane.xlu0 %1092
        %v1094 = vsel %vm1072, %v1069, -inf
        %1095 = vmax.xlane.f32.xlu0 %v1094
        %v1096 = vpop.xlane.xlu0 %1095
        %v1097 = vsub.f32 %v537, %v1075
        %v1098 = vsub.f32 %v613, %v1078
        %v1099 = vsub.f32 %v689, %v1081
        %v1100 = vsub.f32 %v765, %v1084
        %v1101 = vsub.f32 %v841, %v1087
        %v1102 = vsub.f32 %v917, %v1090
        %v1103 = vsub.f32 %v993, %v1093
        %v1104 = vsub.f32 %v1069, %v1096
        %v1105 = vmul.f32 %v1097, 1.442695
        %v1106 = vpow.pop %v1105
        %v1107 = vmul.f32 %v1098, 1.442695
        %v1108 = vpow.pop %v1107
        %v1109 = vmul.f32 %v1099, 1.442695
        %v1110 = vpow.pop %v1109
        %v1111 = vmul.f32 %v1100, 1.442695
        %v1112 = vpow.pop %v1111
        %v1113 = vmul.f32 %v1101, 1.442695
        %v1114 = vpow.pop %v1113
        %v1115 = vmul.f32 %v1102, 1.442695
        %v1116 = vpow.pop %v1115
        %v1117 = vmul.f32 %v1103, 1.442695
        %v1118 = vpow.pop %v1117
        %v1119 = vmul.f32 %v1104, 1.442695
        %v1120 = vpow.pop %v1119
        %v1121 = vsel %vm1072, %v1106, 0.0
        %1122 = vadd.xlane.f32.xlu0 %v1121
        %v1123 = vpop.xlane.xlu0 %1122
        %v1124 = vsel %vm1072, %v1108, 0.0
        %1125 = vadd.xlane.f32.xlu0 %v1124
        %v1126 = vpop.xlane.xlu0 %1125
        %v1127 = vsel %vm1072, %v1110, 0.0
        %1128 = vadd.xlane.f32.xlu0 %v1127
        %v1129 = vpop.xlane.xlu0 %1128
        %v1130 = vsel %vm1072, %v1112, 0.0
        %1131 = vadd.xlane.f32.xlu0 %v1130
        %v1132 = vpop.xlane.xlu0 %1131
        %v1133 = vsel %vm1072, %v1114, 0.0
        %1134 = vadd.xlane.f32.xlu0 %v1133
        %v1135 = vpop.xlane.xlu0 %1134
        %v1136 = vsel %vm1072, %v1116, 0.0
        %1137 = vadd.xlane.f32.xlu0 %v1136
        %v1138 = vpop.xlane.xlu0 %1137
        %v1139 = vsel %vm1072, %v1118, 0.0
        %1140 = vadd.xlane.f32.xlu0 %v1139
        %v1141 = vpop.xlane.xlu0 %1140
        %v1142 = vsel %vm1072, %v1120, 0.0
        %1143 = vadd.xlane.f32.xlu0 %v1142
        %v1144 = vpop.xlane.xlu0 %1143
        %v1145 = vrcp.pop %v1123
        %v1146 = vmul.f32 1.0, %v1145
        %v1147 = vrcp.pop %v1126
        %v1148 = vmul.f32 1.0, %v1147
        %v1149 = vrcp.pop %v1129
        %v1150 = vmul.f32 1.0, %v1149
        %v1151 = vrcp.pop %v1132
        %v1152 = vmul.f32 1.0, %v1151
        %v1153 = vrcp.pop %v1135
        %v1154 = vmul.f32 1.0, %v1153
        %v1155 = vrcp.pop %v1138
        %v1156 = vmul.f32 1.0, %v1155
        %v1157 = vrcp.pop %v1141
        %v1158 = vmul.f32 1.0, %v1157
        %v1159 = vrcp.pop %v1144
        %v1160 = vmul.f32 1.0, %v1159
        %v1161 = vmul.f32 %v1106, %v1146
        %v1162 = vmul.f32 %v1108, %v1148
        %v1163 = vmul.f32 %v1110, %v1150
        %v1164 = vmul.f32 %v1112, %v1152
        %v1165 = vmul.f32 %v1114, %v1154
        %v1166 = vmul.f32 %v1116, %v1156
        %v1167 = vmul.f32 %v1118, %v1158
        %v1168 = vmul.f32 %v1120, %v1160
        %v1170 = vsel %vm1072, %v1161, 0
        %1172 = vmatprep.subr.mxu0 0.0
        %1173 = vmatpush1.msra.mxu0 %v455
        %1174 = vmatprep.subr.mxu0 0.0
        %1175 = vmatpush1.msra.mxu0 0.0
        %1176 = vmatprep.subr.mxu0 0.0
        %1177 = vmatpush1.msra.mxu0 0.0
        %1178 = vmatprep.subr.mxu0 0.0
        %1179 = vmatpush1.msra.mxu0 0.0
        %1180 = vmatprep.subr.mxu0 0.0
        %1181 = vmatpush1.msra.mxu0 0.0
        %1182 = vmatprep.subr.mxu0 0.0
        %1183 = vmatpush1.msra.mxu0 0.0
        %1184 = vmatprep.subr.mxu0 0.0
        %1185 = vmatpush1.msra.mxu0 0.0
        %1186 = vmatprep.subr.mxu0 0.0
        %1187 = vmatpush1.msra.mxu0 0.0
        %1188 = vmatprep.subr.mxu0 0.0
        %1189 = vmatpush1.msra.mxu0 0.0
        %1190 = vmatprep.subr.mxu0 0.0
        %1191 = vmatpush1.msra.mxu0 0.0
        %1192 = vmatprep.subr.mxu0 0.0
        %1193 = vmatpush1.msra.mxu0 0.0
        %1194 = vmatprep.subr.mxu0 0.0
        %1195 = vmatpush1.msra.mxu0 0.0
        %1196 = vmatprep.subr.mxu0 0.0
        %1197 = vmatpush1.msra.mxu0 0.0
        %1198 = vmatprep.subr.mxu0 0.0
        %1199 = vmatpush1.msra.mxu0 0.0
        %1200 = vmatprep.subr.mxu0 0.0
        %1201 = vmatpush1.msra.mxu0 0.0
        %1202 = vmatprep.subr.mxu0 0.0
        %1203 = vmatpush1.msra.mxu0 0.0
        %1204 = vmatprep.subr.mxu0 0.0
        %1205 = vmatpush1.msra.mxu0 0.0
        %1206 = vmatprep.subr.mxu0 0.0
        %1207 = vmatpush1.msra.mxu0 0.0
        %1208 = vmatprep.subr.mxu0 0.0
        %1209 = vmatpush1.msra.mxu0 0.0
        %1210 = vmatprep.subr.mxu0 0.0
        %1211 = vmatpush1.msra.mxu0 0.0
        %1212 = vmatprep.subr.mxu0 0.0
        %1213 = vmatpush1.msra.mxu0 0.0
        %1214 = vmatprep.subr.mxu0 0.0
        %1215 = vmatpush1.msra.mxu0 0.0
        %1216 = vmatprep.subr.mxu0 0.0
        %1217 = vmatpush1.msra.mxu0 0.0
        %1218 = vmatprep.subr.mxu0 0.0
        %1219 = vmatpush1.msra.mxu0 0.0
        %1220 = vmatprep.subr.mxu0 0.0
        %1221 = vmatpush1.msra.mxu0 0.0
        %1222 = vmatprep.subr.mxu0 0.0
        %1223 = vmatpush1.msra.mxu0 0.0
        %1224 = vmatprep.subr.mxu0 0.0
        %1225 = vmatpush1.msra.mxu0 0.0
        %1226 = vmatprep.subr.mxu0 0.0
        %1227 = vmatpush1.msra.mxu0 0.0
        %1228 = vmatprep.subr.mxu0 0.0
        %1229 = vmatpush1.msra.mxu0 0.0
        %1230 = vmatprep.subr.mxu0 0.0
        %1231 = vmatpush1.msra.mxu0 0.0
        %1232 = vmatprep.subr.mxu0 0.0
        %1233 = vmatpush1.msra.mxu0 0.0
        %1234 = vmatprep.subr.mxu0 0.0
        %1235 = vmatpush1.msra.mxu0 0.0
        %1236 = vmatprep.mubr.f32.mxu0 0.0
        %1237 = vmatmul.mubr.f32.gmra.mrb[0].mxu0 %v1170
        %v1238 = vpop.f32.mrb[0].mxu0
        %v1239 = vadd.f32 0.0, %v1238
        %v1240 = vpop.f32.mrb[0].mxu0
        %1241 = vdwg.mxu0
        %v1243 = vsel %vm1072, %v1162, 0
        %1245 = vmatprep.subr.mxu0 0.0
        %1246 = vmatpush1.msra.mxu0 %v456
        %1247 = vmatprep.subr.mxu0 0.0
        %1248 = vmatpush1.msra.mxu0 0.0
        %1249 = vmatprep.subr.mxu0 0.0
        %1250 = vmatpush1.msra.mxu0 0.0
        %1251 = vmatprep.subr.mxu0 0.0
        %1252 = vmatpush1.msra.mxu0 0.0
        %1253 = vmatprep.subr.mxu0 0.0
        %1254 = vmatpush1.msra.mxu0 0.0
        %1255 = vmatprep.subr.mxu0 0.0
        %1256 = vmatpush1.msra.mxu0 0.0
        %1257 = vmatprep.subr.mxu0 0.0
        %1258 = vmatpush1.msra.mxu0 0.0
        %1259 = vmatprep.subr.mxu0 0.0
        %1260 = vmatpush1.msra.mxu0 0.0
        %1261 = vmatprep.subr.mxu0 0.0
        %1262 = vmatpush1.msra.mxu0 0.0
        %1263 = vmatprep.subr.mxu0 0.0
        %1264 = vmatpush1.msra.mxu0 0.0
        %1265 = vmatprep.subr.mxu0 0.0
        %1266 = vmatpush1.msra.mxu0 0.0
        %1267 = vmatprep.subr.mxu0 0.0
        %1268 = vmatpush1.msra.mxu0 0.0
        %1269 = vmatprep.subr.mxu0 0.0
        %1270 = vmatpush1.msra.mxu0 0.0
        %1271 = vmatprep.subr.mxu0 0.0
        %1272 = vmatpush1.msra.mxu0 0.0
        %1273 = vmatprep.subr.mxu0 0.0
        %1274 = vmatpush1.msra.mxu0 0.0
        %1275 = vmatprep.subr.mxu0 0.0
        %1276 = vmatpush1.msra.mxu0 0.0
        %1277 = vmatprep.subr.mxu0 0.0
        %1278 = vmatpush1.msra.mxu0 0.0
        %1279 = vmatprep.subr.mxu0 0.0
        %1280 = vmatpush1.msra.mxu0 0.0
        %1281 = vmatprep.subr.mxu0 0.0
        %1282 = vmatpush1.msra.mxu0 0.0
        %1283 = vmatprep.subr.mxu0 0.0
        %1284 = vmatpush1.msra.mxu0 0.0
        %1285 = vmatprep.subr.mxu0 0.0
        %1286 = vmatpush1.msra.mxu0 0.0
        %1287 = vmatprep.subr.mxu0 0.0
        %1288 = vmatpush1.msra.mxu0 0.0
        %1289 = vmatprep.subr.mxu0 0.0
        %1290 = vmatpush1.msra.mxu0 0.0
        %1291 = vmatprep.subr.mxu0 0.0
        %1292 = vmatpush1.msra.mxu0 0.0
        %1293 = vmatprep.subr.mxu0 0.0
        %1294 = vmatpush1.msra.mxu0 0.0
        %1295 = vmatprep.subr.mxu0 0.0
        %1296 = vmatpush1.msra.mxu0 0.0
        %1297 = vmatprep.subr.mxu0 0.0
        %1298 = vmatpush1.msra.mxu0 0.0
        %1299 = vmatprep.subr.mxu0 0.0
        %1300 = vmatpush1.msra.mxu0 0.0
        %1301 = vmatprep.subr.mxu0 0.0
        %1302 = vmatpush1.msra.mxu0 0.0
        %1303 = vmatprep.subr.mxu0 0.0
        %1304 = vmatpush1.msra.mxu0 0.0
        %1305 = vmatprep.subr.mxu0 0.0
        %1306 = vmatpush1.msra.mxu0 0.0
        %1307 = vmatprep.subr.mxu0 0.0
        %1308 = vmatpush1.msra.mxu0 0.0
        %1309 = vmatprep.mubr.f32.mxu0 0.0
        %1310 = vmatmul.mubr.f32.gmra.mrb[0].mxu0 %v1243
        %v1311 = vpop.f32.mrb[0].mxu0
        %v1312 = vadd.f32 0.0, %v1311
        %v1313 = vpop.f32.mrb[0].mxu0
        %1314 = vdwg.mxu0
        %v1316 = vsel %vm1072, %v1163, 0
        %1318 = vmatprep.subr.mxu0 0.0
        %1319 = vmatpush1.msra.mxu0 %v457
        %1320 = vmatprep.subr.mxu0 0.0
        %1321 = vmatpush1.msra.mxu0 0.0
        %1322 = vmatprep.subr.mxu0 0.0
        %1323 = vmatpush1.msra.mxu0 0.0
        %1324 = vmatprep.subr.mxu0 0.0
        %1325 = vmatpush1.msra.mxu0 0.0
        %1326 = vmatprep.subr.mxu0 0.0
        %1327 = vmatpush1.msra.mxu0 0.0
        %1328 = vmatprep.subr.mxu0 0.0
        %1329 = vmatpush1.msra.mxu0 0.0
        %1330 = vmatprep.subr.mxu0 0.0
        %1331 = vmatpush1.msra.mxu0 0.0
        %1332 = vmatprep.subr.mxu0 0.0
        %1333 = vmatpush1.msra.mxu0 0.0
        %1334 = vmatprep.subr.mxu0 0.0
        %1335 = vmatpush1.msra.mxu0 0.0
        %1336 = vmatprep.subr.mxu0 0.0
        %1337 = vmatpush1.msra.mxu0 0.0
        %1338 = vmatprep.subr.mxu0 0.0
        %1339 = vmatpush1.msra.mxu0 0.0
        %1340 = vmatprep.subr.mxu0 0.0
        %1341 = vmatpush1.msra.mxu0 0.0
        %1342 = vmatprep.subr.mxu0 0.0
        %1343 = vmatpush1.msra.mxu0 0.0
        %1344 = vmatprep.subr.mxu0 0.0
        %1345 = vmatpush1.msra.mxu0 0.0
        %1346 = vmatprep.subr.mxu0 0.0
        %1347 = vmatpush1.msra.mxu0 0.0
        %1348 = vmatprep.subr.mxu0 0.0
        %1349 = vmatpush1.msra.mxu0 0.0
        %1350 = vmatprep.subr.mxu0 0.0
        %1351 = vmatpush1.msra.mxu0 0.0
        %1352 = vmatprep.subr.mxu0 0.0
        %1353 = vmatpush1.msra.mxu0 0.0
        %1354 = vmatprep.subr.mxu0 0.0
        %1355 = vmatpush1.msra.mxu0 0.0
        %1356 = vmatprep.subr.mxu0 0.0
        %1357 = vmatpush1.msra.mxu0 0.0
        %1358 = vmatprep.subr.mxu0 0.0
        %1359 = vmatpush1.msra.mxu0 0.0
        %1360 = vmatprep.subr.mxu0 0.0
        %1361 = vmatpush1.msra.mxu0 0.0
        %1362 = vmatprep.subr.mxu0 0.0
        %1363 = vmatpush1.msra.mxu0 0.0
        %1364 = vmatprep.subr.mxu0 0.0
        %1365 = vmatpush1.msra.mxu0 0.0
        %1366 = vmatprep.subr.mxu0 0.0
        %1367 = vmatpush1.msra.mxu0 0.0
        %1368 = vmatprep.subr.mxu0 0.0
        %1369 = vmatpush1.msra.mxu0 0.0
        %1370 = vmatprep.subr.mxu0 0.0
        %1371 = vmatpush1.msra.mxu0 0.0
        %1372 = vmatprep.subr.mxu0 0.0
        %1373 = vmatpush1.msra.mxu0 0.0
        %1374 = vmatprep.subr.mxu0 0.0
        %1375 = vmatpush1.msra.mxu0 0.0
        %1376 = vmatprep.subr.mxu0 0.0
        %1377 = vmatpush1.msra.mxu0 0.0
        %1378 = vmatprep.subr.mxu0 0.0
        %1379 = vmatpush1.msra.mxu0 0.0
        %1380 = vmatprep.subr.mxu0 0.0
        %1381 = vmatpush1.msra.mxu0 0.0
        %1382 = vmatprep.mubr.f32.mxu0 0.0
        %1383 = vmatmul.mubr.f32.gmra.mrb[0].mxu0 %v1316
        %v1384 = vpop.f32.mrb[0].mxu0
        %v1385 = vadd.f32 0.0, %v1384
        %v1386 = vpop.f32.mrb[0].mxu0
        %1387 = vdwg.mxu0
        %v1389 = vsel %vm1072, %v1164, 0
        %1391 = vmatprep.subr.mxu0 0.0
        %1392 = vmatpush1.msra.mxu0 %v458
        %1393 = vmatprep.subr.mxu0 0.0
        %1394 = vmatpush1.msra.mxu0 0.0
        %1395 = vmatprep.subr.mxu0 0.0
        %1396 = vmatpush1.msra.mxu0 0.0
        %1397 = vmatprep.subr.mxu0 0.0
        %1398 = vmatpush1.msra.mxu0 0.0
        %1399 = vmatprep.subr.mxu0 0.0
        %1400 = vmatpush1.msra.mxu0 0.0
        %1401 = vmatprep.subr.mxu0 0.0
        %1402 = vmatpush1.msra.mxu0 0.0
        %1403 = vmatprep.subr.mxu0 0.0
        %1404 = vmatpush1.msra.mxu0 0.0
        %1405 = vmatprep.subr.mxu0 0.0
        %1406 = vmatpush1.msra.mxu0 0.0
        %1407 = vmatprep.subr.mxu0 0.0
        %1408 = vmatpush1.msra.mxu0 0.0
        %1409 = vmatprep.subr.mxu0 0.0
        %1410 = vmatpush1.msra.mxu0 0.0
        %1411 = vmatprep.subr.mxu0 0.0
        %1412 = vmatpush1.msra.mxu0 0.0
        %1413 = vmatprep.subr.mxu0 0.0
        %1414 = vmatpush1.msra.mxu0 0.0
        %1415 = vmatprep.subr.mxu0 0.0
        %1416 = vmatpush1.msra.mxu0 0.0
        %1417 = vmatprep.subr.mxu0 0.0
        %1418 = vmatpush1.msra.mxu0 0.0
        %1419 = vmatprep.subr.mxu0 0.0
        %1420 = vmatpush1.msra.mxu0 0.0
        %1421 = vmatprep.subr.mxu0 0.0
        %1422 = vmatpush1.msra.mxu0 0.0
        %1423 = vmatprep.subr.mxu0 0.0
        %1424 = vmatpush1.msra.mxu0 0.0
        %1425 = vmatprep.subr.mxu0 0.0
        %1426 = vmatpush1.msra.mxu0 0.0
        %1427 = vmatprep.subr.mxu0 0.0
        %1428 = vmatpush1.msra.mxu0 0.0
        %1429 = vmatprep.subr.mxu0 0.0
        %1430 = vmatpush1.msra.mxu0 0.0
        %1431 = vmatprep.subr.mxu0 0.0
        %1432 = vmatpush1.msra.mxu0 0.0
        %1433 = vmatprep.subr.mxu0 0.0
        %1434 = vmatpush1.msra.mxu0 0.0
        %1435 = vmatprep.subr.mxu0 0.0
        %1436 = vmatpush1.msra.mxu0 0.0
        %1437 = vmatprep.subr.mxu0 0.0
        %1438 = vmatpush1.msra.mxu0 0.0
        %1439 = vmatprep.subr.mxu0 0.0
        %1440 = vmatpush1.msra.mxu0 0.0
        %1441 = vmatprep.subr.mxu0 0.0
        %1442 = vmatpush1.msra.mxu0 0.0
        %1443 = vmatprep.subr.mxu0 0.0
        %1444 = vmatpush1.msra.mxu0 0.0
        %1445 = vmatprep.subr.mxu0 0.0
        %1446 = vmatpush1.msra.mxu0 0.0
        %1447 = vmatprep.subr.mxu0 0.0
        %1448 = vmatpush1.msra.mxu0 0.0
        %1449 = vmatprep.subr.mxu0 0.0
        %1450 = vmatpush1.msra.mxu0 0.0
        %1451 = vmatprep.subr.mxu0 0.0
        %1452 = vmatpush1.msra.mxu0 0.0
        %1453 = vmatprep.subr.mxu0 0.0
        %1454 = vmatpush1.msra.mxu0 0.0
        %1455 = vmatprep.mubr.f32.mxu0 0.0
        %1456 = vmatmul.mubr.f32.gmra.mrb[0].mxu0 %v1389
        %v1457 = vpop.f32.mrb[0].mxu0
        %v1458 = vadd.f32 0.0, %v1457
        %v1459 = vpop.f32.mrb[0].mxu0
        %1460 = vdwg.mxu0
        %v1462 = vsel %vm1072, %v1165, 0
        %1464 = vmatprep.subr.mxu0 0.0
        %1465 = vmatpush1.msra.mxu0 %v459
        %1466 = vmatprep.subr.mxu0 0.0
        %1467 = vmatpush1.msra.mxu0 0.0
        %1468 = vmatprep.subr.mxu0 0.0
        %1469 = vmatpush1.msra.mxu0 0.0
        %1470 = vmatprep.subr.mxu0 0.0
        %1471 = vmatpush1.msra.mxu0 0.0
        %1472 = vmatprep.subr.mxu0 0.0
        %1473 = vmatpush1.msra.mxu0 0.0
        %1474 = vmatprep.subr.mxu0 0.0
        %1475 = vmatpush1.msra.mxu0 0.0
        %1476 = vmatprep.subr.mxu0 0.0
        %1477 = vmatpush1.msra.mxu0 0.0
        %1478 = vmatprep.subr.mxu0 0.0
        %1479 = vmatpush1.msra.mxu0 0.0
        %1480 = vmatprep.subr.mxu0 0.0
        %1481 = vmatpush1.msra.mxu0 0.0
        %1482 = vmatprep.subr.mxu0 0.0
        %1483 = vmatpush1.msra.mxu0 0.0
        %1484 = vmatprep.subr.mxu0 0.0
        %1485 = vmatpush1.msra.mxu0 0.0
        %1486 = vmatprep.subr.mxu0 0.0
        %1487 = vmatpush1.msra.mxu0 0.0
        %1488 = vmatprep.subr.mxu0 0.0
        %1489 = vmatpush1.msra.mxu0 0.0
        %1490 = vmatprep.subr.mxu0 0.0
        %1491 = vmatpush1.msra.mxu0 0.0
        %1492 = vmatprep.subr.mxu0 0.0
        %1493 = vmatpush1.msra.mxu0 0.0
        %1494 = vmatprep.subr.mxu0 0.0
        %1495 = vmatpush1.msra.mxu0 0.0
        %1496 = vmatprep.subr.mxu0 0.0
        %1497 = vmatpush1.msra.mxu0 0.0
        %1498 = vmatprep.subr.mxu0 0.0
        %1499 = vmatpush1.msra.mxu0 0.0
        %1500 = vmatprep.subr.mxu0 0.0
        %1501 = vmatpush1.msra.mxu0 0.0
        %1502 = vmatprep.subr.mxu0 0.0
        %1503 = vmatpush1.msra.mxu0 0.0
        %1504 = vmatprep.subr.mxu0 0.0
        %1505 = vmatpush1.msra.mxu0 0.0
        %1506 = vmatprep.subr.mxu0 0.0
        %1507 = vmatpush1.msra.mxu0 0.0
        %1508 = vmatprep.subr.mxu0 0.0
        %1509 = vmatpush1.msra.mxu0 0.0
        %1510 = vmatprep.subr.mxu0 0.0
        %1511 = vmatpush1.msra.mxu0 0.0
        %1512 = vmatprep.subr.mxu0 0.0
        %1513 = vmatpush1.msra.mxu0 0.0
        %1514 = vmatprep.subr.mxu0 0.0
        %1515 = vmatpush1.msra.mxu0 0.0
        %1516 = vmatprep.subr.mxu0 0.0
        %1517 = vmatpush1.msra.mxu0 0.0
        %1518 = vmatprep.subr.mxu0 0.0
        %1519 = vmatpush1.msra.mxu0 0.0
        %1520 = vmatprep.subr.mxu0 0.0
        %1521 = vmatpush1.msra.mxu0 0.0
        %1522 = vmatprep.subr.mxu0 0.0
        %1523 = vmatpush1.msra.mxu0 0.0
        %1524 = vmatprep.subr.mxu0 0.0
        %1525 = vmatpush1.msra.mxu0 0.0
        %1526 = vmatprep.subr.mxu0 0.0
        %1527 = vmatpush1.msra.mxu0 0.0
        %1528 = vmatprep.mubr.f32.mxu0 0.0
        %1529 = vmatmul.mubr.f32.gmra.mrb[0].mxu0 %v1462
        %v1530 = vpop.f32.mrb[0].mxu0
        %v1531 = vadd.f32 0.0, %v1530
        %v1532 = vpop.f32.mrb[0].mxu0
        %1533 = vdwg.mxu0
        %v1535 = vsel %vm1072, %v1166, 0
        %1537 = vmatprep.subr.mxu0 0.0
        %1538 = vmatpush1.msra.mxu0 %v460
        %1539 = vmatprep.subr.mxu0 0.0
        %1540 = vmatpush1.msra.mxu0 0.0
        %1541 = vmatprep.subr.mxu0 0.0
        %1542 = vmatpush1.msra.mxu0 0.0
        %1543 = vmatprep.subr.mxu0 0.0
        %1544 = vmatpush1.msra.mxu0 0.0
        %1545 = vmatprep.subr.mxu0 0.0
        %1546 = vmatpush1.msra.mxu0 0.0
        %1547 = vmatprep.subr.mxu0 0.0
        %1548 = vmatpush1.msra.mxu0 0.0
        %1549 = vmatprep.subr.mxu0 0.0
        %1550 = vmatpush1.msra.mxu0 0.0
        %1551 = vmatprep.subr.mxu0 0.0
        %1552 = vmatpush1.msra.mxu0 0.0
        %1553 = vmatprep.subr.mxu0 0.0
        %1554 = vmatpush1.msra.mxu0 0.0
        %1555 = vmatprep.subr.mxu0 0.0
        %1556 = vmatpush1.msra.mxu0 0.0
        %1557 = vmatprep.subr.mxu0 0.0
        %1558 = vmatpush1.msra.mxu0 0.0
        %1559 = vmatprep.subr.mxu0 0.0
        %1560 = vmatpush1.msra.mxu0 0.0
        %1561 = vmatprep.subr.mxu0 0.0
        %1562 = vmatpush1.msra.mxu0 0.0
        %1563 = vmatprep.subr.mxu0 0.0
        %1564 = vmatpush1.msra.mxu0 0.0
        %1565 = vmatprep.subr.mxu0 0.0
        %1566 = vmatpush1.msra.mxu0 0.0
        %1567 = vmatprep.subr.mxu0 0.0
        %1568 = vmatpush1.msra.mxu0 0.0
        %1569 = vmatprep.subr.mxu0 0.0
        %1570 = vmatpush1.msra.mxu0 0.0
        %1571 = vmatprep.subr.mxu0 0.0
        %1572 = vmatpush1.msra.mxu0 0.0
        %1573 = vmatprep.subr.mxu0 0.0
        %1574 = vmatpush1.msra.mxu0 0.0
        %1575 = vmatprep.subr.mxu0 0.0
        %1576 = vmatpush1.msra.mxu0 0.0
        %1577 = vmatprep.subr.mxu0 0.0
        %1578 = vmatpush1.msra.mxu0 0.0
        %1579 = vmatprep.subr.mxu0 0.0
        %1580 = vmatpush1.msra.mxu0 0.0
        %1581 = vmatprep.subr.mxu0 0.0
        %1582 = vmatpush1.msra.mxu0 0.0
        %1583 = vmatprep.subr.mxu0 0.0
        %1584 = vmatpush1.msra.mxu0 0.0
        %1585 = vmatprep.subr.mxu0 0.0
        %1586 = vmatpush1.msra.mxu0 0.0
        %1587 = vmatprep.subr.mxu0 0.0
        %1588 = vmatpush1.msra.mxu0 0.0
        %1589 = vmatprep.subr.mxu0 0.0
        %1590 = vmatpush1.msra.mxu0 0.0
        %1591 = vmatprep.subr.mxu0 0.0
        %1592 = vmatpush1.msra.mxu0 0.0
        %1593 = vmatprep.subr.mxu0 0.0
        %1594 = vmatpush1.msra.mxu0 0.0
        %1595 = vmatprep.subr.mxu0 0.0
        %1596 = vmatpush1.msra.mxu0 0.0
        %1597 = vmatprep.subr.mxu0 0.0
        %1598 = vmatpush1.msra.mxu0 0.0
        %1599 = vmatprep.subr.mxu0 0.0
        %1600 = vmatpush1.msra.mxu0 0.0
        %1601 = vmatprep.mubr.f32.mxu0 0.0
        %1602 = vmatmul.mubr.f32.gmra.mrb[0].mxu0 %v1535
        %v1603 = vpop.f32.mrb[0].mxu0
        %v1604 = vadd.f32 0.0, %v1603
        %v1605 = vpop.f32.mrb[0].mxu0
        %1606 = vdwg.mxu0
        %v1608 = vsel %vm1072, %v1167, 0
        %1610 = vmatprep.subr.mxu0 0.0
        %1611 = vmatpush1.msra.mxu0 %v461
        %1612 = vmatprep.subr.mxu0 0.0
        %1613 = vmatpush1.msra.mxu0 0.0
        %1614 = vmatprep.subr.mxu0 0.0
        %1615 = vmatpush1.msra.mxu0 0.0
        %1616 = vmatprep.subr.mxu0 0.0
        %1617 = vmatpush1.msra.mxu0 0.0
        %1618 = vmatprep.subr.mxu0 0.0
        %1619 = vmatpush1.msra.mxu0 0.0
        %1620 = vmatprep.subr.mxu0 0.0
        %1621 = vmatpush1.msra.mxu0 0.0
        %1622 = vmatprep.subr.mxu0 0.0
        %1623 = vmatpush1.msra.mxu0 0.0
        %1624 = vmatprep.subr.mxu0 0.0
        %1625 = vmatpush1.msra.mxu0 0.0
        %1626 = vmatprep.subr.mxu0 0.0
        %1627 = vmatpush1.msra.mxu0 0.0
        %1628 = vmatprep.subr.mxu0 0.0
        %1629 = vmatpush1.msra.mxu0 0.0
        %1630 = vmatprep.subr.mxu0 0.0
        %1631 = vmatpush1.msra.mxu0 0.0
        %1632 = vmatprep.subr.mxu0 0.0
        %1633 = vmatpush1.msra.mxu0 0.0
        %1634 = vmatprep.subr.mxu0 0.0
        %1635 = vmatpush1.msra.mxu0 0.0
        %1636 = vmatprep.subr.mxu0 0.0
        %1637 = vmatpush1.msra.mxu0 0.0
        %1638 = vmatprep.subr.mxu0 0.0
        %1639 = vmatpush1.msra.mxu0 0.0
        %1640 = vmatprep.subr.mxu0 0.0
        %1641 = vmatpush1.msra.mxu0 0.0
        %1642 = vmatprep.subr.mxu0 0.0
        %1643 = vmatpush1.msra.mxu0 0.0
        %1644 = vmatprep.subr.mxu0 0.0
        %1645 = vmatpush1.msra.mxu0 0.0
        %1646 = vmatprep.subr.mxu0 0.0
        %1647 = vmatpush1.msra.mxu0 0.0
        %1648 = vmatprep.subr.mxu0 0.0
        %1649 = vmatpush1.msra.mxu0 0.0
        %1650 = vmatprep.subr.mxu0 0.0
        %1651 = vmatpush1.msra.mxu0 0.0
        %1652 = vmatprep.subr.mxu0 0.0
        %1653 = vmatpush1.msra.mxu0 0.0
        %1654 = vmatprep.subr.mxu0 0.0
        %1655 = vmatpush1.msra.mxu0 0.0
        %1656 = vmatprep.subr.mxu0 0.0
        %1657 = vmatpush1.msra.mxu0 0.0
        %1658 = vmatprep.subr.mxu0 0.0
        %1659 = vmatpush1.msra.mxu0 0.0
        %1660 = vmatprep.subr.mxu0 0.0
        %1661 = vmatpush1.msra.mxu0 0.0
        %1662 = vmatprep.subr.mxu0 0.0
        %1663 = vmatpush1.msra.mxu0 0.0
        %1664 = vmatprep.subr.mxu0 0.0
        %1665 = vmatpush1.msra.mxu0 0.0
        %1666 = vmatprep.subr.mxu0 0.0
        %1667 = vmatpush1.msra.mxu0 0.0
        %1668 = vmatprep.subr.mxu0 0.0
        %1669 = vmatpush1.msra.mxu0 0.0
        %1670 = vmatprep.subr.mxu0 0.0
        %1671 = vmatpush1.msra.mxu0 0.0
        %1672 = vmatprep.subr.mxu0 0.0
        %1673 = vmatpush1.msra.mxu0 0.0
        %1674 = vmatprep.mubr.f32.mxu0 0.0
        %1675 = vmatmul.mubr.f32.gmra.mrb[0].mxu0 %v1608
        %v1676 = vpop.f32.mrb[0].mxu0
        %v1677 = vadd.f32 0.0, %v1676
        %v1678 = vpop.f32.mrb[0].mxu0
        %1679 = vdwg.mxu0
        %v1681 = vsel %vm1072, %v1168, 0
        %1683 = vmatprep.subr.mxu0 0.0
        %1684 = vmatpush1.msra.mxu0 %v462
        %1685 = vmatprep.subr.mxu0 0.0
        %1686 = vmatpush1.msra.mxu0 0.0
        %1687 = vmatprep.subr.mxu0 0.0
        %1688 = vmatpush1.msra.mxu0 0.0
        %1689 = vmatprep.subr.mxu0 0.0
        %1690 = vmatpush1.msra.mxu0 0.0
        %1691 = vmatprep.subr.mxu0 0.0
        %1692 = vmatpush1.msra.mxu0 0.0
        %1693 = vmatprep.subr.mxu0 0.0
        %1694 = vmatpush1.msra.mxu0 0.0
        %1695 = vmatprep.subr.mxu0 0.0
        %1696 = vmatpush1.msra.mxu0 0.0
        %1697 = vmatprep.subr.mxu0 0.0
        %1698 = vmatpush1.msra.mxu0 0.0
        %1699 = vmatprep.subr.mxu0 0.0
        %1700 = vmatpush1.msra.mxu0 0.0
        %1701 = vmatprep.subr.mxu0 0.0
        %1702 = vmatpush1.msra.mxu0 0.0
        %1703 = vmatprep.subr.mxu0 0.0
        %1704 = vmatpush1.msra.mxu0 0.0
        %1705 = vmatprep.subr.mxu0 0.0
        %1706 = vmatpush1.msra.mxu0 0.0
        %1707 = vmatprep.subr.mxu0 0.0
        %1708 = vmatpush1.msra.mxu0 0.0
        %1709 = vmatprep.subr.mxu0 0.0
        %1710 = vmatpush1.msra.mxu0 0.0
        %1711 = vmatprep.subr.mxu0 0.0
        %1712 = vmatpush1.msra.mxu0 0.0
        %1713 = vmatprep.subr.mxu0 0.0
        %1714 = vmatpush1.msra.mxu0 0.0
        %1715 = vmatprep.subr.mxu0 0.0
        %1716 = vmatpush1.msra.mxu0 0.0
        %1717 = vmatprep.subr.mxu0 0.0
        %1718 = vmatpush1.msra.mxu0 0.0
        %1719 = vmatprep.subr.mxu0 0.0
        %1720 = vmatpush1.msra.mxu0 0.0
        %1721 = vmatprep.subr.mxu0 0.0
        %1722 = vmatpush1.msra.mxu0 0.0
        %1723 = vmatprep.subr.mxu0 0.0
        %1724 = vmatpush1.msra.mxu0 0.0
        %1725 = vmatprep.subr.mxu0 0.0
        %1726 = vmatpush1.msra.mxu0 0.0
        %1727 = vmatprep.subr.mxu0 0.0
        %1728 = vmatpush1.msra.mxu0 0.0
        %1729 = vmatprep.subr.mxu0 0.0
        %1730 = vmatpush1.msra.mxu0 0.0
        %1731 = vmatprep.subr.mxu0 0.0
        %1732 = vmatpush1.msra.mxu0 0.0
        %1733 = vmatprep.subr.mxu0 0.0
        %1734 = vmatpush1.msra.mxu0 0.0
        %1735 = vmatprep.subr.mxu0 0.0
        %1736 = vmatpush1.msra.mxu0 0.0
        %1737 = vmatprep.subr.mxu0 0.0
        %1738 = vmatpush1.msra.mxu0 0.0
        %1739 = vmatprep.subr.mxu0 0.0
        %1740 = vmatpush1.msra.mxu0 0.0
        %1741 = vmatprep.subr.mxu0 0.0
        %1742 = vmatpush1.msra.mxu0 0.0
        %1743 = vmatprep.subr.mxu0 0.0
        %1744 = vmatpush1.msra.mxu0 0.0
        %1745 = vmatprep.subr.mxu0 0.0
        %1746 = vmatpush1.msra.mxu0 0.0
        %1747 = vmatprep.mubr.f32.mxu0 0.0
        %1748 = vmatmul.mubr.f32.gmra.mrb[0].mxu0 %v1681
        %v1749 = vpop.f32.mrb[0].mxu0
        %v1750 = vadd.f32 0.0, %v1749
        %v1751 = vpop.f32.mrb[0].mxu0
        %1752 = vdwg.mxu0
        %v1753 = vld [vmem:[%s2] sm:$0xf]
        %s1754 = scalar_lea.vmem %s2, 4
        %v1755 = vld [vmem:[%s1754] sm:$0xf]
        %v1757 = vsel %vm463, %v1312, 0
        %vm1759 = vcmask 1043456
        %v1761 = vsel %vm1759, %v1755, 0
        %1763 = vmatprep.subr.mxu0 0.0
        %1764 = vmatpush1.msra.mxu0 %v1761
        %1765 = vmatprep.subr.mxu0 0.0
        %1766 = vmatpush1.msra.mxu0 0.0
        %1767 = vmatprep.subr.mxu0 0.0
        %1768 = vmatpush1.msra.mxu0 0.0
        %1769 = vmatprep.subr.mxu0 0.0
        %1770 = vmatpush1.msra.mxu0 0.0
        %1771 = vmatprep.subr.mxu0 0.0
        %1772 = vmatpush1.msra.mxu0 0.0
        %1773 = vmatprep.subr.mxu0 0.0
        %1774 = vmatpush1.msra.mxu0 0.0
        %1775 = vmatprep.subr.mxu0 0.0
        %1776 = vmatpush1.msra.mxu0 0.0
        %1777 = vmatprep.subr.mxu0 0.0
        %1778 = vmatpush1.msra.mxu0 0.0
        %1779 = vmatprep.subr.mxu0 0.0
        %1780 = vmatpush1.msra.mxu0 0.0
        %1781 = vmatprep.subr.mxu0 0.0
        %1782 = vmatpush1.msra.mxu0 0.0
        %1783 = vmatprep.subr.mxu0 0.0
        %1784 = vmatpush1.msra.mxu0 0.0
        %1785 = vmatprep.subr.mxu0 0.0
        %1786 = vmatpush1.msra.mxu0 0.0
        %1787 = vmatprep.subr.mxu0 0.0
        %1788 = vmatpush1.msra.mxu0 0.0
        %1789 = vmatprep.subr.mxu0 0.0
        %1790 = vmatpush1.msra.mxu0 0.0
        %1791 = vmatprep.subr.mxu0 0.0
        %1792 = vmatpush1.msra.mxu0 0.0
        %1793 = vmatprep.subr.mxu0 0.0
        %1794 = vmatpush1.msra.mxu0 0.0
        %1795 = vmatprep.subr.mxu0 0.0
        %1796 = vmatpush1.msra.mxu0 0.0
        %1797 = vmatprep.subr.mxu0 0.0
        %1798 = vmatpush1.msra.mxu0 0.0
        %1799 = vmatprep.subr.mxu0 0.0
        %1800 = vmatpush1.msra.mxu0 0.0
        %1801 = vmatprep.subr.mxu0 0.0
        %1802 = vmatpush1.msra.mxu0 0.0
        %1803 = vmatprep.subr.mxu0 0.0
        %1804 = vmatpush1.msra.mxu0 0.0
        %1805 = vmatprep.subr.mxu0 0.0
        %1806 = vmatpush1.msra.mxu0 0.0
        %1807 = vmatprep.subr.mxu0 0.0
        %1808 = vmatpush1.msra.mxu0 0.0
        %1809 = vmatprep.subr.mxu0 0.0
        %1810 = vmatpush1.msra.mxu0 0.0
        %1811 = vmatprep.subr.mxu0 0.0
        %1812 = vmatpush1.msra.mxu0 0.0
        %1813 = vmatprep.subr.mxu0 0.0
        %1814 = vmatpush1.msra.mxu0 0.0
        %1815 = vmatprep.subr.mxu0 0.0
        %1816 = vmatpush1.msra.mxu0 0.0
        %1817 = vmatprep.subr.mxu0 0.0
        %1818 = vmatpush1.msra.mxu0 0.0
        %1819 = vmatprep.subr.mxu0 0.0
        %1820 = vmatpush1.msra.mxu0 0.0
        %1821 = vmatprep.subr.mxu0 0.0
        %1822 = vmatpush1.msra.mxu0 0.0
        %1823 = vmatprep.subr.mxu0 0.0
        %1824 = vmatpush1.msra.mxu0 0.0
        %1825 = vmatprep.subr.mxu0 0.0
        %1826 = vmatpush1.msra.mxu0 0.0
        %1827 = vmatprep.mubr.f32.mxu0 0.0
        %1828 = vmatmul.mubr.f32.gmra.mrb[0].mxu0 %v1757
        %v1829 = vpop.f32.mrb[0].mxu0
        %v1830 = vadd.f32 0.0, %v1829
        %v1831 = vpop.f32.mrb[0].mxu0
        %1832 = vdwg.mxu0
        %v1834 = vsel %vm463, %v1239, 0
        %v1837 = vsel %vm1759, %v1753, 0
        %1839 = vmatprep.subr.mxu0 0.0
        %1840 = vmatpush1.msra.mxu0 %v1837
        %1841 = vmatprep.subr.mxu0 0.0
        %1842 = vmatpush1.msra.mxu0 0.0
        %1843 = vmatprep.subr.mxu0 0.0
        %1844 = vmatpush1.msra.mxu0 0.0
        %1845 = vmatprep.subr.mxu0 0.0
        %1846 = vmatpush1.msra.mxu0 0.0
        %1847 = vmatprep.subr.mxu0 0.0
        %1848 = vmatpush1.msra.mxu0 0.0
        %1849 = vmatprep.subr.mxu0 0.0
        %1850 = vmatpush1.msra.mxu0 0.0
        %1851 = vmatprep.subr.mxu0 0.0
        %1852 = vmatpush1.msra.mxu0 0.0
        %1853 = vmatprep.subr.mxu0 0.0
        %1854 = vmatpush1.msra.mxu0 0.0
        %1855 = vmatprep.subr.mxu0 0.0
        %1856 = vmatpush1.msra.mxu0 0.0
        %1857 = vmatprep.subr.mxu0 0.0
        %1858 = vmatpush1.msra.mxu0 0.0
        %1859 = vmatprep.subr.mxu0 0.0
        %1860 = vmatpush1.msra.mxu0 0.0
        %1861 = vmatprep.subr.mxu0 0.0
        %1862 = vmatpush1.msra.mxu0 0.0
        %1863 = vmatprep.subr.mxu0 0.0
        %1864 = vmatpush1.msra.mxu0 0.0
        %1865 = vmatprep.subr.mxu0 0.0
        %1866 = vmatpush1.msra.mxu0 0.0
        %1867 = vmatprep.subr.mxu0 0.0
        %1868 = vmatpush1.msra.mxu0 0.0
        %1869 = vmatprep.subr.mxu0 0.0
        %1870 = vmatpush1.msra.mxu0 0.0
        %1871 = vmatprep.subr.mxu0 0.0
        %1872 = vmatpush1.msra.mxu0 0.0
        %1873 = vmatprep.subr.mxu0 0.0
        %1874 = vmatpush1.msra.mxu0 0.0
        %1875 = vmatprep.subr.mxu0 0.0
        %1876 = vmatpush1.msra.mxu0 0.0
        %1877 = vmatprep.subr.mxu0 0.0
        %1878 = vmatpush1.msra.mxu0 0.0
        %1879 = vmatprep.subr.mxu0 0.0
        %1880 = vmatpush1.msra.mxu0 0.0
        %1881 = vmatprep.subr.mxu0 0.0
        %1882 = vmatpush1.msra.mxu0 0.0
        %1883 = vmatprep.subr.mxu0 0.0
        %1884 = vmatpush1.msra.mxu0 0.0
        %1885 = vmatprep.subr.mxu0 0.0
        %1886 = vmatpush1.msra.mxu0 0.0
        %1887 = vmatprep.subr.mxu0 0.0
        %1888 = vmatpush1.msra.mxu0 0.0
        %1889 = vmatprep.subr.mxu0 0.0
        %1890 = vmatpush1.msra.mxu0 0.0
        %1891 = vmatprep.subr.mxu0 0.0
        %1892 = vmatpush1.msra.mxu0 0.0
        %1893 = vmatprep.subr.mxu0 0.0
        %1894 = vmatpush1.msra.mxu0 0.0
        %1895 = vmatprep.subr.mxu0 0.0
        %1896 = vmatpush1.msra.mxu0 0.0
        %1897 = vmatprep.subr.mxu0 0.0
        %1898 = vmatpush1.msra.mxu0 0.0
        %1899 = vmatprep.subr.mxu0 0.0
        %1900 = vmatpush1.msra.mxu0 0.0
        %1901 = vmatprep.subr.mxu0 0.0
        %1902 = vmatpush1.msra.mxu0 0.0
        %1903 = vmatprep.mubr.f32.mxu0 0.0
        %1904 = vmatmul.mubr.f32.gmra.mrb[0].mxu0 %v1834
        %v1905 = vpop.f32.mrb[0].mxu0
        %v1906 = vadd.f32 %v1830, %v1905
        %v1907 = vpop.f32.mrb[0].mxu0
        %1908 = vdwg.mxu0
        %s1909 = scalar_lea.vmem %s2, 8
        %v1910 = vld [vmem:[%s1909] sm:$0xf]
        %v1912 = vsel %vm463, %v1385, 0
        %v1915 = vsel %vm1759, %v1910, 0
        %1917 = vmatprep.subr.mxu0 0.0
        %1918 = vmatpush1.msra.mxu0 %v1915
        %1919 = vmatprep.subr.mxu0 0.0
        %1920 = vmatpush1.msra.mxu0 0.0
        %1921 = vmatprep.subr.mxu0 0.0
        %1922 = vmatpush1.msra.mxu0 0.0
        %1923 = vmatprep.subr.mxu0 0.0
        %1924 = vmatpush1.msra.mxu0 0.0
        %1925 = vmatprep.subr.mxu0 0.0
        %1926 = vmatpush1.msra.mxu0 0.0
        %1927 = vmatprep.subr.mxu0 0.0
        %1928 = vmatpush1.msra.mxu0 0.0
        %1929 = vmatprep.subr.mxu0 0.0
        %1930 = vmatpush1.msra.mxu0 0.0
        %1931 = vmatprep.subr.mxu0 0.0
        %1932 = vmatpush1.msra.mxu0 0.0
        %1933 = vmatprep.subr.mxu0 0.0
        %1934 = vmatpush1.msra.mxu0 0.0
        %1935 = vmatprep.subr.mxu0 0.0
        %1936 = vmatpush1.msra.mxu0 0.0
        %1937 = vmatprep.subr.mxu0 0.0
        %1938 = vmatpush1.msra.mxu0 0.0
        %1939 = vmatprep.subr.mxu0 0.0
        %1940 = vmatpush1.msra.mxu0 0.0
        %1941 = vmatprep.subr.mxu0 0.0
        %1942 = vmatpush1.msra.mxu0 0.0
        %1943 = vmatprep.subr.mxu0 0.0
        %1944 = vmatpush1.msra.mxu0 0.0
        %1945 = vmatprep.subr.mxu0 0.0
        %1946 = vmatpush1.msra.mxu0 0.0
        %1947 = vmatprep.subr.mxu0 0.0
        %1948 = vmatpush1.msra.mxu0 0.0
        %1949 = vmatprep.subr.mxu0 0.0
        %1950 = vmatpush1.msra.mxu0 0.0
        %1951 = vmatprep.subr.mxu0 0.0
        %1952 = vmatpush1.msra.mxu0 0.0
        %1953 = vmatprep.subr.mxu0 0.0
        %1954 = vmatpush1.msra.mxu0 0.0
        %1955 = vmatprep.subr.mxu0 0.0
        %1956 = vmatpush1.msra.mxu0 0.0
        %1957 = vmatprep.subr.mxu0 0.0
        %1958 = vmatpush1.msra.mxu0 0.0
        %1959 = vmatprep.subr.mxu0 0.0
        %1960 = vmatpush1.msra.mxu0 0.0
        %1961 = vmatprep.subr.mxu0 0.0
        %1962 = vmatpush1.msra.mxu0 0.0
        %1963 = vmatprep.subr.mxu0 0.0
        %1964 = vmatpush1.msra.mxu0 0.0
        %1965 = vmatprep.subr.mxu0 0.0
        %1966 = vmatpush1.msra.mxu0 0.0
        %1967 = vmatprep.subr.mxu0 0.0
        %1968 = vmatpush1.msra.mxu0 0.0
        %1969 = vmatprep.subr.mxu0 0.0
        %1970 = vmatpush1.msra.mxu0 0.0
        %1971 = vmatprep.subr.mxu0 0.0
        %1972 = vmatpush1.msra.mxu0 0.0
        %1973 = vmatprep.subr.mxu0 0.0
        %1974 = vmatpush1.msra.mxu0 0.0
        %1975 = vmatprep.subr.mxu0 0.0
        %1976 = vmatpush1.msra.mxu0 0.0
        %1977 = vmatprep.subr.mxu0 0.0
        %1978 = vmatpush1.msra.mxu0 0.0
        %1979 = vmatprep.subr.mxu0 0.0
        %1980 = vmatpush1.msra.mxu0 0.0
        %1981 = vmatprep.mubr.f32.mxu0 0.0
        %1982 = vmatmul.mubr.f32.gmra.mrb[0].mxu0 %v1912
        %v1983 = vpop.f32.mrb[0].mxu0
        %v1984 = vadd.f32 0.0, %v1983
        %v1985 = vpop.f32.mrb[0].mxu0
        %1986 = vdwg.mxu0
        %v1987 = vadd.f32 %v1906, %v1984
        %s1988 = scalar_lea.vmem %s2, 12
        %v1989 = vld [vmem:[%s1988] sm:$0xf]
        %v1991 = vsel %vm463, %v1458, 0
        %v1994 = vsel %vm1759, %v1989, 0
        %1996 = vmatprep.subr.mxu0 0.0
        %1997 = vmatpush1.msra.mxu0 %v1994
        %1998 = vmatprep.subr.mxu0 0.0
        %1999 = vmatpush1.msra.mxu0 0.0
        %2000 = vmatprep.subr.mxu0 0.0
        %2001 = vmatpush1.msra.mxu0 0.0
        %2002 = vmatprep.subr.mxu0 0.0
        %2003 = vmatpush1.msra.mxu0 0.0
        %2004 = vmatprep.subr.mxu0 0.0
        %2005 = vmatpush1.msra.mxu0 0.0
        %2006 = vmatprep.subr.mxu0 0.0
        %2007 = vmatpush1.msra.mxu0 0.0
        %2008 = vmatprep.subr.mxu0 0.0
        %2009 = vmatpush1.msra.mxu0 0.0
        %2010 = vmatprep.subr.mxu0 0.0
        %2011 = vmatpush1.msra.mxu0 0.0
        %2012 = vmatprep.subr.mxu0 0.0
        %2013 = vmatpush1.msra.mxu0 0.0
        %2014 = vmatprep.subr.mxu0 0.0
        %2015 = vmatpush1.msra.mxu0 0.0
        %2016 = vmatprep.subr.mxu0 0.0
        %2017 = vmatpush1.msra.mxu0 0.0
        %2018 = vmatprep.subr.mxu0 0.0
        %2019 = vmatpush1.msra.mxu0 0.0
        %2020 = vmatprep.subr.mxu0 0.0
        %2021 = vmatpush1.msra.mxu0 0.0
        %2022 = vmatprep.subr.mxu0 0.0
        %2023 = vmatpush1.msra.mxu0 0.0
        %2024 = vmatprep.subr.mxu0 0.0
        %2025 = vmatpush1.msra.mxu0 0.0
        %2026 = vmatprep.subr.mxu0 0.0
        %2027 = vmatpush1.msra.mxu0 0.0
        %2028 = vmatprep.subr.mxu0 0.0
        %2029 = vmatpush1.msra.mxu0 0.0
        %2030 = vmatprep.subr.mxu0 0.0
        %2031 = vmatpush1.msra.mxu0 0.0
        %2032 = vmatprep.subr.mxu0 0.0
        %2033 = vmatpush1.msra.mxu0 0.0
        %2034 = vmatprep.subr.mxu0 0.0
        %2035 = vmatpush1.msra.mxu0 0.0
        %2036 = vmatprep.subr.mxu0 0.0
        %2037 = vmatpush1.msra.mxu0 0.0
        %2038 = vmatprep.subr.mxu0 0.0
        %2039 = vmatpush1.msra.mxu0 0.0
        %2040 = vmatprep.subr.mxu0 0.0
        %2041 = vmatpush1.msra.mxu0 0.0
        %2042 = vmatprep.subr.mxu0 0.0
        %2043 = vmatpush1.msra.mxu0 0.0
        %2044 = vmatprep.subr.mxu0 0.0
        %2045 = vmatpush1.msra.mxu0 0.0
        %2046 = vmatprep.subr.mxu0 0.0
        %2047 = vmatpush1.msra.mxu0 0.0
        %2048 = vmatprep.subr.mxu0 0.0
        %2049 = vmatpush1.msra.mxu0 0.0
        %2050 = vmatprep.subr.mxu0 0.0
        %2051 = vmatpush1.msra.mxu0 0.0
        %2052 = vmatprep.subr.mxu0 0.0
        %2053 = vmatpush1.msra.mxu0 0.0
        %2054 = vmatprep.subr.mxu0 0.0
        %2055 = vmatpush1.msra.mxu0 0.0
        %2056 = vmatprep.subr.mxu0 0.0
        %2057 = vmatpush1.msra.mxu0 0.0
        %2058 = vmatprep.subr.mxu0 0.0
        %2059 = vmatpush1.msra.mxu0 0.0
        %2060 = vmatprep.mubr.f32.mxu0 0.0
        %2061 = vmatmul.mubr.f32.gmra.mrb[0].mxu0 %v1991
        %v2062 = vpop.f32.mrb[0].mxu0
        %v2063 = vadd.f32 0.0, %v2062
        %v2064 = vpop.f32.mrb[0].mxu0
        %2065 = vdwg.mxu0
        %v2066 = vadd.f32 %v1987, %v2063
        %s2067 = scalar_lea.vmem %s2, 16
        %v2068 = vld [vmem:[%s2067] sm:$0xf]
        %v2070 = vsel %vm463, %v1531, 0
        %v2073 = vsel %vm1759, %v2068, 0
        %2075 = vmatprep.subr.mxu0 0.0
        %2076 = vmatpush1.msra.mxu0 %v2073
        %2077 = vmatprep.subr.mxu0 0.0
        %2078 = vmatpush1.msra.mxu0 0.0
        %2079 = vmatprep.subr.mxu0 0.0
        %2080 = vmatpush1.msra.mxu0 0.0
        %2081 = vmatprep.subr.mxu0 0.0
        %2082 = vmatpush1.msra.mxu0 0.0
        %2083 = vmatprep.subr.mxu0 0.0
        %2084 = vmatpush1.msra.mxu0 0.0
        %2085 = vmatprep.subr.mxu0 0.0
        %2086 = vmatpush1.msra.mxu0 0.0
        %2087 = vmatprep.subr.mxu0 0.0
        %2088 = vmatpush1.msra.mxu0 0.0
        %2089 = vmatprep.subr.mxu0 0.0
        %2090 = vmatpush1.msra.mxu0 0.0
        %2091 = vmatprep.subr.mxu0 0.0
        %2092 = vmatpush1.msra.mxu0 0.0
        %2093 = vmatprep.subr.mxu0 0.0
        %2094 = vmatpush1.msra.mxu0 0.0
        %2095 = vmatprep.subr.mxu0 0.0
        %2096 = vmatpush1.msra.mxu0 0.0
        %2097 = vmatprep.subr.mxu0 0.0
        %2098 = vmatpush1.msra.mxu0 0.0
        %2099 = vmatprep.subr.mxu0 0.0
        %2100 = vmatpush1.msra.mxu0 0.0
        %2101 = vmatprep.subr.mxu0 0.0
        %2102 = vmatpush1.msra.mxu0 0.0
        %2103 = vmatprep.subr.mxu0 0.0
        %2104 = vmatpush1.msra.mxu0 0.0
        %2105 = vmatprep.subr.mxu0 0.0
        %2106 = vmatpush1.msra.mxu0 0.0
        %2107 = vmatprep.subr.mxu0 0.0
        %2108 = vmatpush1.msra.mxu0 0.0
        %2109 = vmatprep.subr.mxu0 0.0
        %2110 = vmatpush1.msra.mxu0 0.0
        %2111 = vmatprep.subr.mxu0 0.0
        %2112 = vmatpush1.msra.mxu0 0.0
        %2113 = vmatprep.subr.mxu0 0.0
        %2114 = vmatpush1.msra.mxu0 0.0
        %2115 = vmatprep.subr.mxu0 0.0
        %2116 = vmatpush1.msra.mxu0 0.0
        %2117 = vmatprep.subr.mxu0 0.0
        %2118 = vmatpush1.msra.mxu0 0.0
        %2119 = vmatprep.subr.mxu0 0.0
        %2120 = vmatpush1.msra.mxu0 0.0
        %2121 = vmatprep.subr.mxu0 0.0
        %2122 = vmatpush1.msra.mxu0 0.0
        %2123 = vmatprep.subr.mxu0 0.0
        %2124 = vmatpush1.msra.mxu0 0.0
        %2125 = vmatprep.subr.mxu0 0.0
        %2126 = vmatpush1.msra.mxu0 0.0
        %2127 = vmatprep.subr.mxu0 0.0
        %2128 = vmatpush1.msra.mxu0 0.0
        %2129 = vmatprep.subr.mxu0 0.0
        %2130 = vmatpush1.msra.mxu0 0.0
        %2131 = vmatprep.subr.mxu0 0.0
        %2132 = vmatpush1.msra.mxu0 0.0
        %2133 = vmatprep.subr.mxu0 0.0
        %2134 = vmatpush1.msra.mxu0 0.0
        %2135 = vmatprep.subr.mxu0 0.0
        %2136 = vmatpush1.msra.mxu0 0.0
        %2137 = vmatprep.subr.mxu0 0.0
        %2138 = vmatpush1.msra.mxu0 0.0
        %2139 = vmatprep.mubr.f32.mxu0 0.0
        %2140 = vmatmul.mubr.f32.gmra.mrb[0].mxu0 %v2070
        %v2141 = vpop.f32.mrb[0].mxu0
        %v2142 = vadd.f32 0.0, %v2141
        %v2143 = vpop.f32.mrb[0].mxu0
        %2144 = vdwg.mxu0
        %v2145 = vadd.f32 %v2066, %v2142
        %s2146 = scalar_lea.vmem %s2, 20
        %v2147 = vld [vmem:[%s2146] sm:$0xf]
        %v2149 = vsel %vm463, %v1604, 0
        %v2152 = vsel %vm1759, %v2147, 0
        %2154 = vmatprep.subr.mxu0 0.0
        %2155 = vmatpush1.msra.mxu0 %v2152
        %2156 = vmatprep.subr.mxu0 0.0
        %2157 = vmatpush1.msra.mxu0 0.0
        %2158 = vmatprep.subr.mxu0 0.0
        %2159 = vmatpush1.msra.mxu0 0.0
        %2160 = vmatprep.subr.mxu0 0.0
        %2161 = vmatpush1.msra.mxu0 0.0
        %2162 = vmatprep.subr.mxu0 0.0
        %2163 = vmatpush1.msra.mxu0 0.0
        %2164 = vmatprep.subr.mxu0 0.0
        %2165 = vmatpush1.msra.mxu0 0.0
        %2166 = vmatprep.subr.mxu0 0.0
        %2167 = vmatpush1.msra.mxu0 0.0
        %2168 = vmatprep.subr.mxu0 0.0
        %2169 = vmatpush1.msra.mxu0 0.0
        %2170 = vmatprep.subr.mxu0 0.0
        %2171 = vmatpush1.msra.mxu0 0.0
        %2172 = vmatprep.subr.mxu0 0.0
        %2173 = vmatpush1.msra.mxu0 0.0
        %2174 = vmatprep.subr.mxu0 0.0
        %2175 = vmatpush1.msra.mxu0 0.0
        %2176 = vmatprep.subr.mxu0 0.0
        %2177 = vmatpush1.msra.mxu0 0.0
        %2178 = vmatprep.subr.mxu0 0.0
        %2179 = vmatpush1.msra.mxu0 0.0
        %2180 = vmatprep.subr.mxu0 0.0
        %2181 = vmatpush1.msra.mxu0 0.0
        %2182 = vmatprep.subr.mxu0 0.0
        %2183 = vmatpush1.msra.mxu0 0.0
        %2184 = vmatprep.subr.mxu0 0.0
        %2185 = vmatpush1.msra.mxu0 0.0
        %2186 = vmatprep.subr.mxu0 0.0
        %2187 = vmatpush1.msra.mxu0 0.0
        %2188 = vmatprep.subr.mxu0 0.0
        %2189 = vmatpush1.msra.mxu0 0.0
        %2190 = vmatprep.subr.mxu0 0.0
        %2191 = vmatpush1.msra.mxu0 0.0
        %2192 = vmatprep.subr.mxu0 0.0
        %2193 = vmatpush1.msra.mxu0 0.0
        %2194 = vmatprep.subr.mxu0 0.0
        %2195 = vmatpush1.msra.mxu0 0.0
        %2196 = vmatprep.subr.mxu0 0.0
        %2197 = vmatpush1.msra.mxu0 0.0
        %2198 = vmatprep.subr.mxu0 0.0
        %2199 = vmatpush1.msra.mxu0 0.0
        %2200 = vmatprep.subr.mxu0 0.0
        %2201 = vmatpush1.msra.mxu0 0.0
        %2202 = vmatprep.subr.mxu0 0.0
        %2203 = vmatpush1.msra.mxu0 0.0
        %2204 = vmatprep.subr.mxu0 0.0
        %2205 = vmatpush1.msra.mxu0 0.0
        %2206 = vmatprep.subr.mxu0 0.0
        %2207 = vmatpush1.msra.mxu0 0.0
        %2208 = vmatprep.subr.mxu0 0.0
        %2209 = vmatpush1.msra.mxu0 0.0
        %2210 = vmatprep.subr.mxu0 0.0
        %2211 = vmatpush1.msra.mxu0 0.0
        %2212 = vmatprep.subr.mxu0 0.0
        %2213 = vmatpush1.msra.mxu0 0.0
        %2214 = vmatprep.subr.mxu0 0.0
        %2215 = vmatpush1.msra.mxu0 0.0
        %2216 = vmatprep.subr.mxu0 0.0
        %2217 = vmatpush1.msra.mxu0 0.0
        %2218 = vmatprep.mubr.f32.mxu0 0.0
        %2219 = vmatmul.mubr.f32.gmra.mrb[0].mxu0 %v2149
        %v2220 = vpop.f32.mrb[0].mxu0
        %v2221 = vadd.f32 0.0, %v2220
        %v2222 = vpop.f32.mrb[0].mxu0
        %2223 = vdwg.mxu0
        %v2224 = vadd.f32 %v2145, %v2221
        %s2225 = scalar_lea.vmem %s2, 24
        %v2226 = vld [vmem:[%s2225] sm:$0xf]
        %v2228 = vsel %vm463, %v1677, 0
        %v2231 = vsel %vm1759, %v2226, 0
        %2233 = vmatprep.subr.mxu0 0.0
        %2234 = vmatpush1.msra.mxu0 %v2231
        %2235 = vmatprep.subr.mxu0 0.0
        %2236 = vmatpush1.msra.mxu0 0.0
        %2237 = vmatprep.subr.mxu0 0.0
        %2238 = vmatpush1.msra.mxu0 0.0
        %2239 = vmatprep.subr.mxu0 0.0
        %2240 = vmatpush1.msra.mxu0 0.0
        %2241 = vmatprep.subr.mxu0 0.0
        %2242 = vmatpush1.msra.mxu0 0.0
        %2243 = vmatprep.subr.mxu0 0.0
        %2244 = vmatpush1.msra.mxu0 0.0
        %2245 = vmatprep.subr.mxu0 0.0
        %2246 = vmatpush1.msra.mxu0 0.0
        %2247 = vmatprep.subr.mxu0 0.0
        %2248 = vmatpush1.msra.mxu0 0.0
        %2249 = vmatprep.subr.mxu0 0.0
        %2250 = vmatpush1.msra.mxu0 0.0
        %2251 = vmatprep.subr.mxu0 0.0
        %2252 = vmatpush1.msra.mxu0 0.0
        %2253 = vmatprep.subr.mxu0 0.0
        %2254 = vmatpush1.msra.mxu0 0.0
        %2255 = vmatprep.subr.mxu0 0.0
        %2256 = vmatpush1.msra.mxu0 0.0
        %2257 = vmatprep.subr.mxu0 0.0
        %2258 = vmatpush1.msra.mxu0 0.0
        %2259 = vmatprep.subr.mxu0 0.0
        %2260 = vmatpush1.msra.mxu0 0.0
        %2261 = vmatprep.subr.mxu0 0.0
        %2262 = vmatpush1.msra.mxu0 0.0
        %2263 = vmatprep.subr.mxu0 0.0
        %2264 = vmatpush1.msra.mxu0 0.0
        %2265 = vmatprep.subr.mxu0 0.0
        %2266 = vmatpush1.msra.mxu0 0.0
        %2267 = vmatprep.subr.mxu0 0.0
        %2268 = vmatpush1.msra.mxu0 0.0
        %2269 = vmatprep.subr.mxu0 0.0
        %2270 = vmatpush1.msra.mxu0 0.0
        %2271 = vmatprep.subr.mxu0 0.0
        %2272 = vmatpush1.msra.mxu0 0.0
        %2273 = vmatprep.subr.mxu0 0.0
        %2274 = vmatpush1.msra.mxu0 0.0
        %2275 = vmatprep.subr.mxu0 0.0
        %2276 = vmatpush1.msra.mxu0 0.0
        %2277 = vmatprep.subr.mxu0 0.0
        %2278 = vmatpush1.msra.mxu0 0.0
        %2279 = vmatprep.subr.mxu0 0.0
        %2280 = vmatpush1.msra.mxu0 0.0
        %2281 = vmatprep.subr.mxu0 0.0
        %2282 = vmatpush1.msra.mxu0 0.0
        %2283 = vmatprep.subr.mxu0 0.0
        %2284 = vmatpush1.msra.mxu0 0.0
        %2285 = vmatprep.subr.mxu0 0.0
        %2286 = vmatpush1.msra.mxu0 0.0
        %2287 = vmatprep.subr.mxu0 0.0
        %2288 = vmatpush1.msra.mxu0 0.0
        %2289 = vmatprep.subr.mxu0 0.0
        %2290 = vmatpush1.msra.mxu0 0.0
        %2291 = vmatprep.subr.mxu0 0.0
        %2292 = vmatpush1.msra.mxu0 0.0
        %2293 = vmatprep.subr.mxu0 0.0
        %2294 = vmatpush1.msra.mxu0 0.0
        %2295 = vmatprep.subr.mxu0 0.0
        %2296 = vmatpush1.msra.mxu0 0.0
        %2297 = vmatprep.mubr.f32.mxu0 0.0
        %2298 = vmatmul.mubr.f32.gmra.mrb[0].mxu0 %v2228
        %v2299 = vpop.f32.mrb[0].mxu0
        %v2300 = vadd.f32 0.0, %v2299
        %v2301 = vpop.f32.mrb[0].mxu0
        %2302 = vdwg.mxu0
        %v2303 = vadd.f32 %v2224, %v2300
        %s2304 = scalar_lea.vmem %s2, 28
        %v2305 = vld [vmem:[%s2304] sm:$0xf]
        %v2307 = vsel %vm463, %v1750, 0
        %v2310 = vsel %vm1759, %v2305, 0
        %2312 = vmatprep.subr.mxu0 0.0
        %2313 = vmatpush1.msra.mxu0 %v2310
        %2314 = vmatprep.subr.mxu0 0.0
        %2315 = vmatpush1.msra.mxu0 0.0
        %2316 = vmatprep.subr.mxu0 0.0
        %2317 = vmatpush1.msra.mxu0 0.0
        %2318 = vmatprep.subr.mxu0 0.0
        %2319 = vmatpush1.msra.mxu0 0.0
        %2320 = vmatprep.subr.mxu0 0.0
        %2321 = vmatpush1.msra.mxu0 0.0
        %2322 = vmatprep.subr.mxu0 0.0
        %2323 = vmatpush1.msra.mxu0 0.0
        %2324 = vmatprep.subr.mxu0 0.0
        %2325 = vmatpush1.msra.mxu0 0.0
        %2326 = vmatprep.subr.mxu0 0.0
        %2327 = vmatpush1.msra.mxu0 0.0
        %2328 = vmatprep.subr.mxu0 0.0
        %2329 = vmatpush1.msra.mxu0 0.0
        %2330 = vmatprep.subr.mxu0 0.0
        %2331 = vmatpush1.msra.mxu0 0.0
        %2332 = vmatprep.subr.mxu0 0.0
        %2333 = vmatpush1.msra.mxu0 0.0
        %2334 = vmatprep.subr.mxu0 0.0
        %2335 = vmatpush1.msra.mxu0 0.0
        %2336 = vmatprep.subr.mxu0 0.0
        %2337 = vmatpush1.msra.mxu0 0.0
        %2338 = vmatprep.subr.mxu0 0.0
        %2339 = vmatpush1.msra.mxu0 0.0
        %2340 = vmatprep.subr.mxu0 0.0
        %2341 = vmatpush1.msra.mxu0 0.0
        %2342 = vmatprep.subr.mxu0 0.0
        %2343 = vmatpush1.msra.mxu0 0.0
        %2344 = vmatprep.subr.mxu0 0.0
        %2345 = vmatpush1.msra.mxu0 0.0
        %2346 = vmatprep.subr.mxu0 0.0
        %2347 = vmatpush1.msra.mxu0 0.0
        %2348 = vmatprep.subr.mxu0 0.0
        %2349 = vmatpush1.msra.mxu0 0.0
        %2350 = vmatprep.subr.mxu0 0.0
        %2351 = vmatpush1.msra.mxu0 0.0
        %2352 = vmatprep.subr.mxu0 0.0
        %2353 = vmatpush1.msra.mxu0 0.0
        %2354 = vmatprep.subr.mxu0 0.0
        %2355 = vmatpush1.msra.mxu0 0.0
        %2356 = vmatprep.subr.mxu0 0.0
        %2357 = vmatpush1.msra.mxu0 0.0
        %2358 = vmatprep.subr.mxu0 0.0
        %2359 = vmatpush1.msra.mxu0 0.0
        %2360 = vmatprep.subr.mxu0 0.0
        %2361 = vmatpush1.msra.mxu0 0.0
        %2362 = vmatprep.subr.mxu0 0.0
        %2363 = vmatpush1.msra.mxu0 0.0
        %2364 = vmatprep.subr.mxu0 0.0
        %2365 = vmatpush1.msra.mxu0 0.0
        %2366 = vmatprep.subr.mxu0 0.0
        %2367 = vmatpush1.msra.mxu0 0.0
        %2368 = vmatprep.subr.mxu0 0.0
        %2369 = vmatpush1.msra.mxu0 0.0
        %2370 = vmatprep.subr.mxu0 0.0
        %2371 = vmatpush1.msra.mxu0 0.0
        %2372 = vmatprep.subr.mxu0 0.0
        %2373 = vmatpush1.msra.mxu0 0.0
        %2374 = vmatprep.subr.mxu0 0.0
        %2375 = vmatpush1.msra.mxu0 0.0
        %2376 = vmatprep.mubr.f32.mxu0 0.0
        %2377 = vmatmul.mubr.f32.gmra.mrb[0].mxu0 %v2307
        %v2378 = vpop.f32.mrb[0].mxu0
        %v2379 = vadd.f32 0.0, %v2378
        %v2380 = vpop.f32.mrb[0].mxu0
        %2381 = vdwg.mxu0
        %v2382 = vadd.f32 %v2303, %v2379
        %v2383 = vld [vmem:[%s3] sm:$0x1]
        %v2385 = vlaneseq
        %v2386 = vshrl.u32 %v2385, 7
        %v2387 = vsub.s32 0, %v2386
        %v2388 = vrot.slane %v2383, %v2387
        %v2390 = vadd.f32 %v2382, %v2388
        %vm2391 = vcmask 261120
        %2392 = vst.msk [vmem:[%s204] sm:$0xff] %vm2391, %v2390
        %s2393 = sand.u32 %s129, 1
        %s2394 = scalar_lea.sflag [#allocation6], %s2393
        %s2395 = sand.u32 %s129, 1
        %s2396 = smul.addr %s2395, 8
        %s2397 = scalar_lea.vmem [#allocation5], %s2396
        // Predicated region
        $region41: #{tpu_custom_call.1} parent=35 // pred_check
          %p2398 = pneg %p139
        $region42: #{tpu_custom_call.1} parent=35 // pred_check_branch
          %2400 = sbr.rel (%p2398) target = $region44
        $region43: #{tpu_custom_call.1} parent=35 // pred_region
          %s2402 = ssub.s32 128, 128
          %2403 = vsyncadd %s2394, %s2402
          %s2404 = sadd.s32 %s23, %s22
          %s2405 = smul.addr %s2404, 128
          %s2406 = scalar_lea.hbm %s4, %s2405
          %s2408 = sshll.u32 %s2397, 4
          %s2409 = int_to_ptr.vmem [resolvable:$true] %s2408
          %2411 = dma.vmem_to_hbm [thread:$0]  %s2409, 128, %s2406, %s2394
        $region44: #{tpu_custom_call.1} parent=35 // pred_fallthru
          _
      $region36: #{tpu_custom_call.1} parent=5 // pred_fallthru
        _
      %p2412 = scmp.le.s32.totalorder 2, %s13
      // Predicated region
      $region45: #{tpu_custom_call.1} parent=5 // pred_check
        %p2413 = pneg %p2412
      $region46: #{tpu_custom_call.1} parent=5 // pred_check_branch
        %2415 = sbr.rel (%p2413) target = $region48
      $region47: #{tpu_custom_call.1} parent=5 // pred_region
        %s2416 = ssub.s32 %s13, 2
        // Predicated region
        $region49: #{tpu_custom_call.1} parent=47 // pred_check
          %p2417 = pneg %p145
        $region50: #{tpu_custom_call.1} parent=47 // pred_check_branch
          %2419 = sbr.rel (%p2417) target = $region52
        $region51: #{tpu_custom_call.1} parent=47 // pred_region
          %s2420 = sand.u32 %s130, 1
          %s2421 = scalar_lea.sflag [#allocation6], %s2420
          %s2422 = sand.u32 %s130, 1
          %s2423 = smul.addr %s2422, 8
          %s2424 = scalar_lea.vmem [#allocation5], %s2423
          %2425 = dma.done %s2421, 128
        $region52: #{tpu_custom_call.1} parent=47 // pred_fallthru
          _
      $region48: #{tpu_custom_call.1} parent=5 // pred_fallthru
        _
    $region6: #{tpu_custom_call.1} parent=1 // loop_footer
      %s17 = sadd.s32 1, %s13
    $region7: #{tpu_custom_call.1} parent=1 // loop_footer_branch
      %12 = sbr.rel target = $region3
    $region8: #{tpu_custom_call.1} parent=1 // loop_exit
      _
    %2426 = vsyncpa [#allocation6], 1
    %s2427 = scalar_lea.sflag [#allocation6], 1
    %2428 = vsyncpa %s2427, 1

</llo_original>
